<compile_context>
chip_gen: v6e
topology: v6e:2x2x1
jax: 0.10.0
libtpu: 0.0.40
codegen_flags: <defaults>
</compile_context>

<pallas_src>
import functools
import math

import jax
import jax.numpy as jnp
from jax import lax
from jax.experimental import pallas as pl
from jax.experimental.pallas import tpu as pltpu


def _round_up(x, m):
    return ((x + m - 1) // m) * m


def _pad2d(a, rows, cols, dtype=None):
    dtype = a.dtype if dtype is None else dtype
    if a.shape == (rows, cols):
        return a.astype(dtype)
    return jnp.zeros((rows, cols), dtype).at[: a.shape[0], : a.shape[1]].set(
        a.astype(dtype))


# ----------------------------------------------------------------------------
# Pallas kernel: LayerNorm1 + FFN(1x1 convs, relu) + residual + LayerNorm2.
# Input rows already contain s = x + s4_1(x)[0] (residual folded upstream).
# Grid = (row tiles, d_ff tiles).  xn (norm1 output) and the conv2 partial sum
# live in f32 VMEM scratch across the d_ff axis.
# ----------------------------------------------------------------------------
def s4_ffn_kernel(s_ref, g1_ref, be1_ref, w1_ref, b1_ref, w2_ref, b2_ref,
                  g2_ref, be2_ref, o_ref, xn_ref, acc_ref, *, d_valid):
    eps = 1e-5                        # torch.nn.LayerNorm default
    inv_d = 1.0 / d_valid
    k = pl.program_id(1)

    def ln(z, g, b):
        # One-pass mean/variance.  Padded channel columns are exactly zero and
        # gamma/beta are zero-padded, so summing over the padded lane dim and
        # dividing by the true d_model matches torch.nn.LayerNorm, and padded
        # output lanes stay exactly zero.
        mu = jnp.sum(z, axis=-1, keepdims=True) * inv_d
        var = jnp.sum(z * z, axis=-1, keepdims=True) * inv_d - mu * mu
        return (z - mu) * lax.rsqrt(var + eps) * g + b

    @pl.when(k == 0)
    def _():
        s = s_ref[...].astype(jnp.float32)        # bf16 stream -> f32 math
        xn_ref[...] = ln(s, g1_ref[...], be1_ref[...])
        acc_ref[...] = jnp.zeros_like(acc_ref)

    # conv1 (kernel_size=1) == xn @ W1^T + b1, relu.  bf16 MXU operands,
    # f32 accumulation (dropout = identity).
    h = jnp.dot(xn_ref[...].astype(jnp.bfloat16), w1_ref[...],
                preferred_element_type=jnp.float32) + b1_ref[...]
    h = jnp.maximum(h, 0.0)
    # conv2 (kernel_size=1): accumulate the partial h @ W2^T in f32 scratch.
    acc_ref[...] += jnp.dot(h.astype(jnp.bfloat16), w2_ref[...],
                            preferred_element_type=jnp.float32)

    @pl.when(k == pl.num_programs(1) - 1)
    def _():
        y = acc_ref[...] + b2_ref[...]
        o_ref[...] = ln(xn_ref[...] + y, g2_ref[...], be2_ref[...]).astype(
            o_ref.dtype)


# ----------------------------------------------------------------------------
# Tile selection / VMEM accounting
# ----------------------------------------------------------------------------
def _vmem_budget():
    """Generation-aware (budget, scoped-limit) in bytes."""
    try:
        cap = int(pltpu.get_tpu_info().vmem_capacity_bytes)
    except Exception:
        cap = 64 << 20                      # conservative (v7x-sized) fallback
    if cap >= (96 << 20):                   # v5e / v6e: 128 MiB per TensorCore
        budget, limit = 96 << 20, 110 << 20
    else:                                   # v7x: 64 MiB per TensorCore
        budget, limit = 36 << 20, 48 << 20
    return budget, min(limit, cap - (8 << 20))


def _tf_options(Fp):
    """Candidate d_ff tile widths (multiples of 128), no-K-tiling (Fp) first."""
    nb = Fp // 128
    opts = []
    for kf in range(1, nb + 1):
        tf = (-(-nb // kf)) * 128
        if tf not in opts:
            opts.append(tf)
    return opts


def _choose_tiles(M, Dp, Fp, budget_bytes):
    """Pick (tm, tf): prefer a large row tile, K-tiling d_ff if needed."""
    def usage(tm, tf, kf):
        wbuf = 1 if kf == 1 else 2                       # weight block buffers
        return (2 * tm * Dp * 2                          # bf16 input rows, 2 bufs
                + 2 * tm * Dp * 4                        # f32 output rows, 2 bufs
                + wbuf * (Dp * tf * 2 + tf * Dp * 2 + tf * 4)   # w1/w2 bf16 + b1
                + 6 * Dp * 4                             # gammas/betas/b2, 1 buf
                + 2 * tm * Dp * 4                        # xn / y-acc scratch (f32)
                + 3 * tm * Dp * 4 + 2 * tm * Dp * 2      # s_f32/z/LN temps, bf16 casts
                + 2 * tm * tf * 4 + tm * tf * 2)         # h, matmul result, h_bf16
    for tm in (512, 256, 128, 64, 32, 16, 8):
        for tf in _tf_options(Fp):
            kf = -(-Fp // tf)
            if usage(tm, tf, kf) <= budget_bytes:
                return tm, tf
    return 8, 128


# ----------------------------------------------------------------------------
# Wrapper around the fused FFN/LN kernel
# ----------------------------------------------------------------------------
def s4_ffn_block(s2d, p):
    M, D = s2d.shape
    F = p["w1"].shape[1]
    Dp, Fp = _round_up(D, 128), _round_up(F, 128)
    # TODO(synk): pad channels to 256 lanes on v6e/v7x when D/F are odd
    # multiples of 128 (2x256x256 MXU) once the padded-FLOP/VMEM tradeoff wins.
    budget, limit = _vmem_budget()
    tm, tf = _choose_tiles(M, Dp, Fp, budget)

    tm = min(tm, max(8, _round_up(M, 8)))               # don't over-pad tiny M
    while tm > 8 and (_round_up(M, tm) - M) * 8 > M:    # cap row-pad waste ~12.5%
        tm = max(8, (tm // 2) // 8 * 8)
    if M > 8 and _round_up(M, tm) // tm < 2:            # >=2 row tiles so both
        tm = max(8, (tm // 2) // 8 * 8)                 # v7x TensorCores get work

    kf = -(-Fp // tf)
    Fp2 = kf * tf
    Mp = _round_up(M, tm)

    # Activations streamed as bf16 (halves input HBM bytes).  Skip the pad copy
    # entirely when no padding is needed.
    if (Mp, Dp) == (M, D):
        s_in = s2d.astype(jnp.bfloat16)
    else:
        s_in = jnp.zeros((Mp, Dp), jnp.bfloat16).at[:M, :D].set(
            s2d.astype(jnp.bfloat16))

    g1, be1 = _pad2d(p["g1"], 1, Dp), _pad2d(p["be1"], 1, Dp)
    g2, be2 = _pad2d(p["g2"], 1, Dp), _pad2d(p["be2"], 1, Dp)
    # TODO(synk): on v7x, optionally ship w1/w2 as fp8 (bf16 x fp8 MXU) to halve
    # weight VMEM/HBM, gated behind an accuracy check.
    w1 = _pad2d(p["w1"], Dp, Fp2, jnp.bfloat16)
    w2 = _pad2d(p["w2"], Fp2, Dp, jnp.bfloat16)
    b1 = _pad2d(p["b1"], 1, Fp2)
    b2 = _pad2d(p["b2"], 1, Dp)

    grid = (Mp // tm, kf)

    def build(single_buffer_consts):
        def const_spec(shape):
            # Constant-index blocks are fetched once and revisited; a single
            # buffer avoids a wasted second VMEM copy of each constant.
            if single_buffer_consts:
                return pl.BlockSpec(shape, lambda i, k: (0, 0),
                                    pipeline_mode=pl.Buffered(1))
            return pl.BlockSpec(shape, lambda i, k: (0, 0))

        def w_spec(shape, index_map):
            if kf == 1 and single_buffer_consts:     # constant when not K-tiled
                return pl.BlockSpec(shape, index_map,
                                    pipeline_mode=pl.Buffered(1))
            return pl.BlockSpec(shape, index_map)    # streamed: default 2 bufs

        return pl.pallas_call(
            functools.partial(s4_ffn_kernel, d_valid=D),
            out_shape=jax.ShapeDtypeStruct((Mp, Dp), jnp.float32),
            grid_spec=pltpu.PrefetchScalarGridSpec(
                num_scalar_prefetch=0,
                grid=grid,
                in_specs=[
                    pl.BlockSpec((tm, Dp), lambda i, k: (i, 0)),   # s rows
                    const_spec((1, Dp)), const_spec((1, Dp)),      # norm1 g/b
                    w_spec((Dp, tf), lambda i, k: (0, k)),         # conv1 W^T
                    w_spec((1, tf), lambda i, k: (0, k)),          # conv1 bias
                    w_spec((tf, Dp), lambda i, k: (k, 0)),         # conv2 W^T
                    const_spec((1, Dp)),                           # conv2 bias
                    const_spec((1, Dp)), const_spec((1, Dp)),      # norm2 g/b
                ],
                out_specs=pl.BlockSpec((tm, Dp), lambda i, k: (i, 0)),
                scratch_shapes=[pltpu.VMEM((tm, Dp), jnp.float32),   # xn
                                pltpu.VMEM((tm, Dp), jnp.float32)],  # y acc
            ),
            compiler_params=pltpu.CompilerParams(
                dimension_semantics=("parallel", "arbitrary"),
                vmem_limit_bytes=limit,
            ),
            cost_estimate=pl.CostEstimate(
                flops=4 * Mp * Dp * Fp2,
                transcendentals=2 * Mp,
                bytes_accessed=(Mp * Dp * (2 + 4)
                                + ((Mp // tm) if kf > 1 else 1) * 2 * Dp * Fp2 * 2
                                + (6 * Dp + Fp2) * 4),
            ),
        )

    args = (s_in, g1, be1, w1, b1, w2, b2, g2, be2)
    try:
        out = build(True)(*args)
    except Exception:
        # Fallback for jaxlib versions without BlockSpec(pipeline_mode=...):
        # default double-buffered constants (more VMEM, same semantics).
        out = build(False)(*args)

    if (Mp, Dp) == (M, D):
        return out
    return out[:M, :D]


# ----------------------------------------------------------------------------
# s4_1 submodule (injected in the original code, not defined in S4M.py).
# TODO(synk): s4_1 is an externally injected submodule; emulated here as a
# deterministic S4D-style diagonal-SSM depthwise causal convolution whose
# forward returns (y, state); we take [0].  Kept in plain-JAX glue.
# The outer residual is folded in (skip_d + 1), so this returns x + s4_1(x)[0].
# ----------------------------------------------------------------------------
def s4d_kernel_K(p, L):
    dt = jnp.exp(p["log_dt"])[:, None]            # (D, 1)
    A = p["a_real"] + 1j * p["a_imag"]            # (D, N)
    C = p["c_real"] + 1j * p["c_imag"]            # (D, N)
    dtA = dt * A
    Bbar = (jnp.exp(dtA) - 1.0) / A               # ZOH discretization
    t = jnp.arange(L, dtype=jnp.float32)[None, None, :]
    K = 2.0 * jnp.real(
        jnp.einsum("dn,dnl->dl", C * Bbar, jnp.exp(dtA[:, :, None] * t)))
    return K                                      # (D, L)


def s4d_mix_plus_x(x, p, L):
    """Returns x + s4_1(x)[0] via an O(D*L*logL) FFT causal convolution.

    FFTs run along the contiguous last axis (x transposed to (B, D, L)) so
    XLA does not insert strided-transpose traffic on the complex intermediate.
    """
    K = s4d_kernel_K(p, L)                        # (D, L)
    n = 2 * L
    xT = jnp.swapaxes(x, 1, 2)                    # (B, D, L)
    Kf = jnp.fft.rfft(K, n=n, axis=-1)            # (D, n//2+1)
    xf = jnp.fft.rfft(xT, n=n, axis=-1)           # (B, D, n//2+1)
    y = jnp.fft.irfft(xf * Kf[None], n=n, axis=-1)[..., :L]   # (B, D, L)
    y = jnp.swapaxes(y, 1, 2)                     # (B, L, D)
    # skip connection of s4_1 plus the outer residual (folded: skip_d + 1)
    return y + x * (p["skip_d"] + 1.0)[None, None, :]


# ----------------------------------------------------------------------------
# Parameters (deterministic init; no checkpoint loading)
# ----------------------------------------------------------------------------
def init_params(key, d_model, d_ff, n_state):
    ks = jax.random.split(key, 8)
    s1 = 1.0 / math.sqrt(d_model)
    s2 = 1.0 / math.sqrt(d_ff)
    return dict(
        # LayerNorms: PyTorch defaults (gamma=1, beta=0)
        g1=jnp.ones((1, d_model), jnp.float32),
        be1=jnp.zeros((1, d_model), jnp.float32),
        g2=jnp.ones((1, d_model), jnp.float32),
        be2=jnp.zeros((1, d_model), jnp.float32),
        # conv1: torch weight (d_ff, d_model, 1) stored transposed as (d_model, d_ff)
        w1=jax.random.uniform(ks[0], (d_model, d_ff), jnp.float32, -s1, s1),
        b1=jax.random.uniform(ks[1], (1, d_ff), jnp.float32, -s1, s1),
        # conv2: torch weight (d_model, d_ff, 1) stored transposed as (d_ff, d_model)
        w2=jax.random.uniform(ks[2], (d_ff, d_model), jnp.float32, -s2, s2),
        b2=jax.random.uniform(ks[3], (1, d_model), jnp.float32, -s2, s2),
        # s4_1 (S4D-lin style) params
        log_dt=jnp.log(jnp.full((d_model,), 0.05, jnp.float32)),
        a_real=-0.5 * jnp.ones((d_model, n_state), jnp.float32),
        a_imag=jnp.pi * jnp.broadcast_to(
            jnp.arange(n_state, dtype=jnp.float32)[None, :], (d_model, n_state)),
        c_real=jax.random.normal(ks[4], (d_model, n_state), jnp.float32) / math.sqrt(n_state),
        c_imag=jax.random.normal(ks[5], (d_model, n_state), jnp.float32) / math.sqrt(n_state),
        skip_d=jax.random.normal(ks[6], (d_model,), jnp.float32),
    )


# ----------------------------------------------------------------------------
# Full S4_Layer.forward
# ----------------------------------------------------------------------------
def s4_layer_forward(x, p):
    B, L, D = x.shape
    s = s4d_mix_plus_x(x, p, L)                   # x + s4_1(x)[0]   (glue)
    out2d = s4_ffn_block(s.reshape(B * L, D), p)  # fused FFN/LN Pallas kernel
    return out2d.reshape(B, L, D)


# plain-JAX f32 reference (uses the direct Toeplitz S4D form, so it also
# cross-checks the FFT glue path)
def ref_forward(x, p):
    B, L, D = x.shape
    K = s4d_kernel_K(p, L)                        # (D, L)
    idx = jnp.arange(L)
    shift = idx[:, None] - idx[None, :]           # (L, L)
    T = jnp.where(shift >= 0, K[:, jnp.clip(shift, 0, L - 1)], 0.0)   # (D, L, L)
    new_x = jnp.einsum("dlk,bkd->bld", T, x) + x * p["skip_d"][None, None, :]
    s = x + new_x

    def ln(z, g, b):
        mu = z.mean(-1, keepdims=True)
        var = ((z - mu) ** 2).mean(-1, keepdims=True)
        return (z - mu) / jnp.sqrt(var + 1e-5) * g.reshape(-1) + b.reshape(-1)

    xn = ln(s, p["g1"], p["be1"])
    h = jnp.maximum(xn @ p["w1"] + p["b1"].reshape(-1), 0.0)
    y = h @ p["w2"] + p["b2"].reshape(-1)
    return ln(xn + y, p["g2"], p["be2"])


if __name__ == "__main__":
    B, L, d_model, d_ff, n_state = 2, 8, 32, 64, 16
    key = jax.random.PRNGKey(0)
    kx, kp = jax.random.split(key)
    x = jax.random.normal(kx, (B, L, d_model), jnp.float32)
    params = init_params(kp, d_model, d_ff, n_state)

    out = s4_layer_forward(x, params)
    jax.block_until_ready(out)

    ref = ref_forward(x, params)
    assert out.shape == (B, L, d_model)
    # bf16 activation streaming + bf16 MXU operands (f32 accumulation) vs. the
    # pure-f32 reference -> loosened tolerance (gross bugs produce O(1) errors).
    err = float(jnp.max(jnp.abs(out - ref)))
    assert err < 1e-1, f"max abs err {err}"
    print("KERNEL_OK")
</pallas_src>

<mosaic_0001>
module attributes {stable_mosaic.version = 11 : i64} {
  func.func @s4_ffn_kernel(%arg0: i32, %arg1: i32, %arg2: memref<8x128xbf16, #tpu.memory_space<vmem>>, %arg3: memref<1x128xf32, #tpu.memory_space<vmem>>, %arg4: memref<1x128xf32, #tpu.memory_space<vmem>>, %arg5: memref<128x128xbf16, #tpu.memory_space<vmem>>, %arg6: memref<1x128xf32, #tpu.memory_space<vmem>>, %arg7: memref<128x128xbf16, #tpu.memory_space<vmem>>, %arg8: memref<1x128xf32, #tpu.memory_space<vmem>>, %arg9: memref<1x128xf32, #tpu.memory_space<vmem>>, %arg10: memref<1x128xf32, #tpu.memory_space<vmem>>, %arg11: memref<8x128xf32, #tpu.memory_space<vmem>>, %arg12: memref<8x128xf32, #tpu.memory_space<vmem>>, %arg13: memref<8x128xf32, #tpu.memory_space<vmem>>) attributes {dimension_semantics = [#tpu.dimension_semantics<parallel>, #tpu.dimension_semantics<arbitrary>], iteration_bounds = array<i64: 2, 1>, scalar_prefetch = 0 : i64, scratch_operands = 2 : i64, tpu.core_type = #tpu.core_type<tc>, window_params = [{transform_indices = @transform_0, window_bounds = array<i64: 8, 128>}, {pipeline_mode = #tpu.pipeline_mode<synchronous>, transform_indices = @transform_1, window_bounds = array<i64: 1, 128>}, {pipeline_mode = #tpu.pipeline_mode<synchronous>, transform_indices = @transform_2, window_bounds = array<i64: 1, 128>}, {pipeline_mode = #tpu.pipeline_mode<synchronous>, transform_indices = @transform_3, window_bounds = array<i64: 128, 128>}, {pipeline_mode = #tpu.pipeline_mode<synchronous>, transform_indices = @transform_4, window_bounds = array<i64: 1, 128>}, {pipeline_mode = #tpu.pipeline_mode<synchronous>, transform_indices = @transform_5, window_bounds = array<i64: 128, 128>}, {pipeline_mode = #tpu.pipeline_mode<synchronous>, transform_indices = @transform_6, window_bounds = array<i64: 1, 128>}, {pipeline_mode = #tpu.pipeline_mode<synchronous>, transform_indices = @transform_7, window_bounds = array<i64: 1, 128>}, {pipeline_mode = #tpu.pipeline_mode<synchronous>, transform_indices = @transform_8, window_bounds = array<i64: 1, 128>}, {transform_indices = @transform_9, window_bounds = array<i64: 8, 128>}]} {
    %c0_i32 = arith.constant 0 : i32
    %0 = arith.cmpi eq, %arg1, %c0_i32 : i32
    %1 = arith.extui %0 : i1 to i32
    %c0_i32_0 = arith.constant 0 : i32
    %2 = arith.cmpi ne, %1, %c0_i32_0 : i32
    scf.if %2 {
      %c0_16 = arith.constant 0 : index
      %c0_17 = arith.constant 0 : index
      %21 = vector.load %arg2[%c0_16, %c0_17] : memref<8x128xbf16, #tpu.memory_space<vmem>>, vector<8x128xbf16>
      %22 = arith.extf %21 : vector<8x128xbf16> to vector<8x128xf32>
      %c0_18 = arith.constant 0 : index
      %c0_19 = arith.constant 0 : index
      %23 = vector.load %arg3[%c0_18, %c0_19] : memref<1x128xf32, #tpu.memory_space<vmem>>, vector<1x128xf32>
      %c0_20 = arith.constant 0 : index
      %c0_21 = arith.constant 0 : index
      %24 = vector.load %arg4[%c0_20, %c0_21] : memref<1x128xf32, #tpu.memory_space<vmem>>, vector<1x128xf32>
      %cst_22 = arith.constant dense<0.000000e+00> : vector<8xf32>
      %25 = vector.multi_reduction <add>, %22, %cst_22 [1] : vector<8x128xf32> to vector<8xf32>
      %26 = vector.shape_cast %25 : vector<8xf32> to vector<8x1xf32>
      %cst_23 = arith.constant 3.125000e-02 : f32
      %27 = vector.broadcast %cst_23 : f32 to vector<8x1xf32>
      %28 = arith.mulf %26, %27 : vector<8x1xf32>
      %29 = arith.mulf %22, %22 : vector<8x128xf32>
      %cst_24 = arith.constant dense<0.000000e+00> : vector<8xf32>
      %30 = vector.multi_reduction <add>, %29, %cst_24 [1] : vector<8x128xf32> to vector<8xf32>
      %31 = vector.shape_cast %30 : vector<8xf32> to vector<8x1xf32>
      %cst_25 = arith.constant 3.125000e-02 : f32
      %32 = vector.broadcast %cst_25 : f32 to vector<8x1xf32>
      %33 = arith.mulf %31, %32 : vector<8x1xf32>
      %34 = arith.mulf %28, %28 : vector<8x1xf32>
      %35 = arith.subf %33, %34 : vector<8x1xf32>
      %36 = vector.broadcast %28 : vector<8x1xf32> to vector<8x128xf32>
      %37 = arith.subf %22, %36 : vector<8x128xf32>
      %cst_26 = arith.constant 9.99999974E-6 : f32
      %38 = vector.broadcast %cst_26 : f32 to vector<8x1xf32>
      %39 = arith.addf %35, %38 : vector<8x1xf32>
      %40 = math.rsqrt %39 : vector<8x1xf32>
      %41 = vector.broadcast %40 : vector<8x1xf32> to vector<8x128xf32>
      %42 = arith.mulf %37, %41 : vector<8x128xf32>
      %43 = vector.broadcast %23 : vector<1x128xf32> to vector<8x128xf32>
      %44 = arith.mulf %42, %43 : vector<8x128xf32>
      %45 = vector.broadcast %24 : vector<1x128xf32> to vector<8x128xf32>
      %46 = arith.addf %44, %45 : vector<8x128xf32>
      %c0_27 = arith.constant 0 : index
      %c0_28 = arith.constant 0 : index
      %47 = vector.load %arg12[%c0_27, %c0_28] : memref<8x128xf32, #tpu.memory_space<vmem>>, vector<8x128xf32>
      tpu.vector_store %arg12[%c0_27, %c0_28], %46 {strides = array<i32>} : memref<8x128xf32, #tpu.memory_space<vmem>>, vector<8x128xf32>,
      %cst_29 = arith.constant 0.000000e+00 : f32
      %48 = vector.broadcast %cst_29 : f32 to vector<8x128xf32>
      %c0_30 = arith.constant 0 : index
      %c0_31 = arith.constant 0 : index
      %49 = vector.load %arg13[%c0_30, %c0_31] : memref<8x128xf32, #tpu.memory_space<vmem>>, vector<8x128xf32>
      tpu.vector_store %arg13[%c0_30, %c0_31], %48 {strides = array<i32>} : memref<8x128xf32, #tpu.memory_space<vmem>>, vector<8x128xf32>,
    } else {
    }
    %c0 = arith.constant 0 : index
    %c0_1 = arith.constant 0 : index
    %3 = vector.load %arg12[%c0, %c0_1] : memref<8x128xf32, #tpu.memory_space<vmem>>, vector<8x128xf32>
    %4 = arith.truncf %3 : vector<8x128xf32> to vector<8x128xbf16>
    %c0_2 = arith.constant 0 : index
    %c0_3 = arith.constant 0 : index
    %5 = vector.load %arg5[%c0_2, %c0_3] : memref<128x128xbf16, #tpu.memory_space<vmem>>, vector<128x128xbf16>
    %cst = arith.constant dense<0.000000e+00> : vector<8x128xf32>
    %6 = tpu.matmul %4, %5, %cst {dimension_numbers = #tpu.dot_dimension_numbers<[1], [0], [0], [1], [0, 0, 1, 1], [], []>} : vector<8x128xbf16>, vector<128x128xbf16>, vector<8x128xf32> -> vector<8x128xf32>
    %c0_4 = arith.constant 0 : index
    %c0_5 = arith.constant 0 : index
    %7 = vector.load %arg6[%c0_4, %c0_5] : memref<1x128xf32, #tpu.memory_space<vmem>>, vector<1x128xf32>
    %8 = vector.broadcast %7 : vector<1x128xf32> to vector<8x128xf32>
    %9 = arith.addf %6, %8 : vector<8x128xf32>
    %cst_6 = arith.constant 0.000000e+00 : f32
    %10 = vector.broadcast %cst_6 : f32 to vector<8x128xf32>
    %11 = arith.maximumf %9, %10 : vector<8x128xf32>
    %c0_7 = arith.constant 0 : index
    %c0_8 = arith.constant 0 : index
    %12 = vector.load %arg13[%c0_7, %c0_8] : memref<8x128xf32, #tpu.memory_space<vmem>>, vector<8x128xf32>
    %13 = arith.truncf %11 : vector<8x128xf32> to vector<8x128xbf16>
    %c0_9 = arith.constant 0 : index
    %c0_10 = arith.constant 0 : index
    %14 = vector.load %arg7[%c0_9, %c0_10] : memref<128x128xbf16, #tpu.memory_space<vmem>>, vector<128x128xbf16>
    %cst_11 = arith.constant dense<0.000000e+00> : vector<8x128xf32>
    %15 = tpu.matmul %13, %14, %cst_11 {dimension_numbers = #tpu.dot_dimension_numbers<[1], [0], [0], [1], [0, 0, 1, 1], [], []>} : vector<8x128xbf16>, vector<128x128xbf16>, vector<8x128xf32> -> vector<8x128xf32>
    %16 = arith.addf %12, %15 : vector<8x128xf32>
    %c0_12 = arith.constant 0 : index
    %c0_13 = arith.constant 0 : index
    %17 = vector.load %arg13[%c0_12, %c0_13] : memref<8x128xf32, #tpu.memory_space<vmem>>, vector<8x128xf32>
    tpu.vector_store %arg13[%c0_12, %c0_13], %16 {strides = array<i32>} : memref<8x128xf32, #tpu.memory_space<vmem>>, vector<8x128xf32>,
    %c0_i32_14 = arith.constant 0 : i32
    %18 = arith.cmpi eq, %arg1, %c0_i32_14 : i32
    %19 = arith.extui %18 : i1 to i32
    %c0_i32_15 = arith.constant 0 : i32
    %20 = arith.cmpi ne, %19, %c0_i32_15 : i32
    scf.if %20 {
      %c0_16 = arith.constant 0 : index
      %c0_17 = arith.constant 0 : index
      %21 = vector.load %arg13[%c0_16, %c0_17] : memref<8x128xf32, #tpu.memory_space<vmem>>, vector<8x128xf32>
      %c0_18 = arith.constant 0 : index
      %c0_19 = arith.constant 0 : index
      %22 = vector.load %arg8[%c0_18, %c0_19] : memref<1x128xf32, #tpu.memory_space<vmem>>, vector<1x128xf32>
      %23 = vector.broadcast %22 : vector<1x128xf32> to vector<8x128xf32>
      %24 = arith.addf %21, %23 : vector<8x128xf32>
      %c0_20 = arith.constant 0 : index
      %c0_21 = arith.constant 0 : index
      %25 = vector.load %arg12[%c0_20, %c0_21] : memref<8x128xf32, #tpu.memory_space<vmem>>, vector<8x128xf32>
      %26 = arith.addf %25, %24 : vector<8x128xf32>
      %c0_22 = arith.constant 0 : index
      %c0_23 = arith.constant 0 : index
      %27 = vector.load %arg9[%c0_22, %c0_23] : memref<1x128xf32, #tpu.memory_space<vmem>>, vector<1x128xf32>
      %c0_24 = arith.constant 0 : index
      %c0_25 = arith.constant 0 : index
      %28 = vector.load %arg10[%c0_24, %c0_25] : memref<1x128xf32, #tpu.memory_space<vmem>>, vector<1x128xf32>
      %cst_26 = arith.constant dense<0.000000e+00> : vector<8xf32>
      %29 = vector.multi_reduction <add>, %26, %cst_26 [1] : vector<8x128xf32> to vector<8xf32>
      %30 = vector.shape_cast %29 : vector<8xf32> to vector<8x1xf32>
      %cst_27 = arith.constant 3.125000e-02 : f32
      %31 = vector.broadcast %cst_27 : f32 to vector<8x1xf32>
      %32 = arith.mulf %30, %31 : vector<8x1xf32>
      %33 = arith.mulf %26, %26 : vector<8x128xf32>
      %cst_28 = arith.constant dense<0.000000e+00> : vector<8xf32>
      %34 = vector.multi_reduction <add>, %33, %cst_28 [1] : vector<8x128xf32> to vector<8xf32>
      %35 = vector.shape_cast %34 : vector<8xf32> to vector<8x1xf32>
      %cst_29 = arith.constant 3.125000e-02 : f32
      %36 = vector.broadcast %cst_29 : f32 to vector<8x1xf32>
      %37 = arith.mulf %35, %36 : vector<8x1xf32>
      %38 = arith.mulf %32, %32 : vector<8x1xf32>
      %39 = arith.subf %37, %38 : vector<8x1xf32>
      %40 = vector.broadcast %32 : vector<8x1xf32> to vector<8x128xf32>
      %41 = arith.subf %26, %40 : vector<8x128xf32>
      %cst_30 = arith.constant 9.99999974E-6 : f32
      %42 = vector.broadcast %cst_30 : f32 to vector<8x1xf32>
      %43 = arith.addf %39, %42 : vector<8x1xf32>
      %44 = math.rsqrt %43 : vector<8x1xf32>
      %45 = vector.broadcast %44 : vector<8x1xf32> to vector<8x128xf32>
      %46 = arith.mulf %41, %45 : vector<8x128xf32>
      %47 = vector.broadcast %27 : vector<1x128xf32> to vector<8x128xf32>
      %48 = arith.mulf %46, %47 : vector<8x128xf32>
      %49 = vector.broadcast %28 : vector<1x128xf32> to vector<8x128xf32>
      %50 = arith.addf %48, %49 : vector<8x128xf32>
      %c0_31 = arith.constant 0 : index
      %c0_32 = arith.constant 0 : index
      %51 = vector.load %arg11[%c0_31, %c0_32] : memref<8x128xf32, #tpu.memory_space<vmem>>, vector<8x128xf32>
      tpu.vector_store %arg11[%c0_31, %c0_32], %50 {strides = array<i32>} : memref<8x128xf32, #tpu.memory_space<vmem>>, vector<8x128xf32>,
    } else {
    }
    return
  }
  func.func @transform_0(%arg0: i32, %arg1: i32) -> (i32, i32) {
    %c0_i32 = arith.constant 0 : i32
    %c0_i32_0 = arith.constant 0 : i32
    return %arg0, %c0_i32 : i32, i32
  }
  func.func @transform_1(%arg0: i32, %arg1: i32) -> (i32, i32) {
    %c0_i32 = arith.constant 0 : i32
    %c0_i32_0 = arith.constant 0 : i32
    %c0_i32_1 = arith.constant 0 : i32
    return %c0_i32, %c0_i32_0 : i32, i32
  }
  func.func @transform_2(%arg0: i32, %arg1: i32) -> (i32, i32) {
    %c0_i32 = arith.constant 0 : i32
    %c0_i32_0 = arith.constant 0 : i32
    %c0_i32_1 = arith.constant 0 : i32
    return %c0_i32, %c0_i32_0 : i32, i32
  }
  func.func @transform_3(%arg0: i32, %arg1: i32) -> (i32, i32) {
    %c0_i32 = arith.constant 0 : i32
    %c0_i32_0 = arith.constant 0 : i32
    return %c0_i32, %arg1 : i32, i32
  }
  func.func @transform_4(%arg0: i32, %arg1: i32) -> (i32, i32) {
    %c0_i32 = arith.constant 0 : i32
    %c0_i32_0 = arith.constant 0 : i32
    return %c0_i32, %arg1 : i32, i32
  }
  func.func @transform_5(%arg0: i32, %arg1: i32) -> (i32, i32) {
    %c0_i32 = arith.constant 0 : i32
    %c0_i32_0 = arith.constant 0 : i32
    return %arg1, %c0_i32 : i32, i32
  }
  func.func @transform_6(%arg0: i32, %arg1: i32) -> (i32, i32) {
    %c0_i32 = arith.constant 0 : i32
    %c0_i32_0 = arith.constant 0 : i32
    %c0_i32_1 = arith.constant 0 : i32
    return %c0_i32, %c0_i32_0 : i32, i32
  }
  func.func @transform_7(%arg0: i32, %arg1: i32) -> (i32, i32) {
    %c0_i32 = arith.constant 0 : i32
    %c0_i32_0 = arith.constant 0 : i32
    %c0_i32_1 = arith.constant 0 : i32
    return %c0_i32, %c0_i32_0 : i32, i32
  }
  func.func @transform_8(%arg0: i32, %arg1: i32) -> (i32, i32) {
    %c0_i32 = arith.constant 0 : i32
    %c0_i32_0 = arith.constant 0 : i32
    %c0_i32_1 = arith.constant 0 : i32
    return %c0_i32, %c0_i32_0 : i32, i32
  }
  func.func @transform_9(%arg0: i32, %arg1: i32) -> (i32, i32) {
    %c0_i32 = arith.constant 0 : i32
    %c0_i32_0 = arith.constant 0 : i32
    return %arg0, %c0_i32 : i32, i32
  }
}

module attributes {stable_mosaic.version = 11 : i64} {
  func.func @s4_ffn_kernel(%arg0: i32, %arg1: i32, %arg2: memref<8x128xbf16, #tpu.memory_space<vmem>>, %arg3: memref<1x128xf32, #tpu.memory_space<vmem>>, %arg4: memref<1x128xf32, #tpu.memory_space<vmem>>, %arg5: memref<128x128xbf16, #tpu.memory_space<vmem>>, %arg6: memref<1x128xf32, #tpu.memory_space<vmem>>, %arg7: memref<128x128xbf16, #tpu.memory_space<vmem>>, %arg8: memref<1x128xf32, #tpu.memory_space<vmem>>, %arg9: memref<1x128xf32, #tpu.memory_space<vmem>>, %arg10: memref<1x128xf32, #tpu.memory_space<vmem>>, %arg11: memref<8x128xf32, #tpu.memory_space<vmem>>, %arg12: memref<8x128xf32, #tpu.memory_space<vmem>>, %arg13: memref<8x128xf32, #tpu.memory_space<vmem>>) attributes {dimension_semantics = [#tpu.dimension_semantics<parallel>, #tpu.dimension_semantics<arbitrary>], iteration_bounds = array<i64: 2, 1>, scalar_prefetch = 0 : i64, scratch_operands = 2 : i64, tpu.core_type = #tpu.core_type<tc>, window_params = [{transform_indices = @transform_0, window_bounds = array<i64: 8, 128>}, {pipeline_mode = #tpu.pipeline_mode<synchronous>, transform_indices = @transform_1, window_bounds = array<i64: 1, 128>}, {pipeline_mode = #tpu.pipeline_mode<synchronous>, transform_indices = @transform_2, window_bounds = array<i64: 1, 128>}, {transform_indices = @transform_3, window_bounds = array<i64: 128, 128>}, {transform_indices = @transform_4, window_bounds = array<i64: 1, 128>}, {transform_indices = @transform_5, window_bounds = array<i64: 128, 128>}, {pipeline_mode = #tpu.pipeline_mode<synchronous>, transform_indices = @transform_6, window_bounds = array<i64: 1, 128>}, {pipeline_mode = #tpu.pipeline_mode<synchronous>, transform_indices = @transform_7, window_bounds = array<i64: 1, 128>}, {pipeline_mode = #tpu.pipeline_mode<synchronous>, transform_indices = @transform_8, window_bounds = array<i64: 1, 128>}, {transform_indices = @transform_9, window_bounds = array<i64: 8, 128>}]} {
    %c0_i32 = arith.constant 0 : i32
    %0 = arith.cmpi eq, %arg1, %c0_i32 : i32
    %1 = arith.extui %0 : i1 to i32
    %c0_i32_0 = arith.constant 0 : i32
    %2 = arith.cmpi ne, %1, %c0_i32_0 : i32
    scf.if %2 {
      %c0_16 = arith.constant 0 : index
      %c0_17 = arith.constant 0 : index
      %21 = vector.load %arg2[%c0_16, %c0_17] : memref<8x128xbf16, #tpu.memory_space<vmem>>, vector<8x128xbf16>
      %22 = arith.extf %21 : vector<8x128xbf16> to vector<8x128xf32>
      %c0_18 = arith.constant 0 : index
      %c0_19 = arith.constant 0 : index
      %23 = vector.load %arg3[%c0_18, %c0_19] : memref<1x128xf32, #tpu.memory_space<vmem>>, vector<1x128xf32>
      %c0_20 = arith.constant 0 : index
      %c0_21 = arith.constant 0 : index
      %24 = vector.load %arg4[%c0_20, %c0_21] : memref<1x128xf32, #tpu.memory_space<vmem>>, vector<1x128xf32>
      %cst_22 = arith.constant dense<0.000000e+00> : vector<8xf32>
      %25 = vector.multi_reduction <add>, %22, %cst_22 [1] : vector<8x128xf32> to vector<8xf32>
      %26 = vector.shape_cast %25 : vector<8xf32> to vector<8x1xf32>
      %cst_23 = arith.constant 3.125000e-02 : f32
      %27 = vector.broadcast %cst_23 : f32 to vector<8x1xf32>
      %28 = arith.mulf %26, %27 : vector<8x1xf32>
      %29 = arith.mulf %22, %22 : vector<8x128xf32>
      %cst_24 = arith.constant dense<0.000000e+00> : vector<8xf32>
      %30 = vector.multi_reduction <add>, %29, %cst_24 [1] : vector<8x128xf32> to vector<8xf32>
      %31 = vector.shape_cast %30 : vector<8xf32> to vector<8x1xf32>
      %cst_25 = arith.constant 3.125000e-02 : f32
      %32 = vector.broadcast %cst_25 : f32 to vector<8x1xf32>
      %33 = arith.mulf %31, %32 : vector<8x1xf32>
      %34 = arith.mulf %28, %28 : vector<8x1xf32>
      %35 = arith.subf %33, %34 : vector<8x1xf32>
      %36 = vector.broadcast %28 : vector<8x1xf32> to vector<8x128xf32>
      %37 = arith.subf %22, %36 : vector<8x128xf32>
      %cst_26 = arith.constant 9.99999974E-6 : f32
      %38 = vector.broadcast %cst_26 : f32 to vector<8x1xf32>
      %39 = arith.addf %35, %38 : vector<8x1xf32>
      %40 = math.rsqrt %39 : vector<8x1xf32>
      %41 = vector.broadcast %40 : vector<8x1xf32> to vector<8x128xf32>
      %42 = arith.mulf %37, %41 : vector<8x128xf32>
      %43 = vector.broadcast %23 : vector<1x128xf32> to vector<8x128xf32>
      %44 = arith.mulf %42, %43 : vector<8x128xf32>
      %45 = vector.broadcast %24 : vector<1x128xf32> to vector<8x128xf32>
      %46 = arith.addf %44, %45 : vector<8x128xf32>
      %c0_27 = arith.constant 0 : index
      %c0_28 = arith.constant 0 : index
      %47 = vector.load %arg12[%c0_27, %c0_28] : memref<8x128xf32, #tpu.memory_space<vmem>>, vector<8x128xf32>
      tpu.vector_store %arg12[%c0_27, %c0_28], %46 {strides = array<i32>} : memref<8x128xf32, #tpu.memory_space<vmem>>, vector<8x128xf32>,
      %cst_29 = arith.constant 0.000000e+00 : f32
      %48 = vector.broadcast %cst_29 : f32 to vector<8x128xf32>
      %c0_30 = arith.constant 0 : index
      %c0_31 = arith.constant 0 : index
      %49 = vector.load %arg13[%c0_30, %c0_31] : memref<8x128xf32, #tpu.memory_space<vmem>>, vector<8x128xf32>
      tpu.vector_store %arg13[%c0_30, %c0_31], %48 {strides = array<i32>} : memref<8x128xf32, #tpu.memory_space<vmem>>, vector<8x128xf32>,
    } else {
    }
    %c0 = arith.constant 0 : index
    %c0_1 = arith.constant 0 : index
    %3 = vector.load %arg12[%c0, %c0_1] : memref<8x128xf32, #tpu.memory_space<vmem>>, vector<8x128xf32>
    %4 = arith.truncf %3 : vector<8x128xf32> to vector<8x128xbf16>
    %c0_2 = arith.constant 0 : index
    %c0_3 = arith.constant 0 : index
    %5 = vector.load %arg5[%c0_2, %c0_3] : memref<128x128xbf16, #tpu.memory_space<vmem>>, vector<128x128xbf16>
    %cst = arith.constant dense<0.000000e+00> : vector<8x128xf32>
    %6 = tpu.matmul %4, %5, %cst {dimension_numbers = #tpu.dot_dimension_numbers<[1], [0], [0], [1], [0, 0, 1, 1], [], []>} : vector<8x128xbf16>, vector<128x128xbf16>, vector<8x128xf32> -> vector<8x128xf32>
    %c0_4 = arith.constant 0 : index
    %c0_5 = arith.constant 0 : index
    %7 = vector.load %arg6[%c0_4, %c0_5] : memref<1x128xf32, #tpu.memory_space<vmem>>, vector<1x128xf32>
    %8 = vector.broadcast %7 : vector<1x128xf32> to vector<8x128xf32>
    %9 = arith.addf %6, %8 : vector<8x128xf32>
    %cst_6 = arith.constant 0.000000e+00 : f32
    %10 = vector.broadcast %cst_6 : f32 to vector<8x128xf32>
    %11 = arith.maximumf %9, %10 : vector<8x128xf32>
    %c0_7 = arith.constant 0 : index
    %c0_8 = arith.constant 0 : index
    %12 = vector.load %arg13[%c0_7, %c0_8] : memref<8x128xf32, #tpu.memory_space<vmem>>, vector<8x128xf32>
    %13 = arith.truncf %11 : vector<8x128xf32> to vector<8x128xbf16>
    %c0_9 = arith.constant 0 : index
    %c0_10 = arith.constant 0 : index
    %14 = vector.load %arg7[%c0_9, %c0_10] : memref<128x128xbf16, #tpu.memory_space<vmem>>, vector<128x128xbf16>
    %cst_11 = arith.constant dense<0.000000e+00> : vector<8x128xf32>
    %15 = tpu.matmul %13, %14, %cst_11 {dimension_numbers = #tpu.dot_dimension_numbers<[1], [0], [0], [1], [0, 0, 1, 1], [], []>} : vector<8x128xbf16>, vector<128x128xbf16>, vector<8x128xf32> -> vector<8x128xf32>
    %16 = arith.addf %12, %15 : vector<8x128xf32>
    %c0_12 = arith.constant 0 : index
    %c0_13 = arith.constant 0 : index
    %17 = vector.load %arg13[%c0_12, %c0_13] : memref<8x128xf32, #tpu.memory_space<vmem>>, vector<8x128xf32>
    tpu.vector_store %arg13[%c0_12, %c0_13], %16 {strides = array<i32>} : memref<8x128xf32, #tpu.memory_space<vmem>>, vector<8x128xf32>,
    %c0_i32_14 = arith.constant 0 : i32
    %18 = arith.cmpi eq, %arg1, %c0_i32_14 : i32
    %19 = arith.extui %18 : i1 to i32
    %c0_i32_15 = arith.constant 0 : i32
    %20 = arith.cmpi ne, %19, %c0_i32_15 : i32
    scf.if %20 {
      %c0_16 = arith.constant 0 : index
      %c0_17 = arith.constant 0 : index
      %21 = vector.load %arg13[%c0_16, %c0_17] : memref<8x128xf32, #tpu.memory_space<vmem>>, vector<8x128xf32>
      %c0_18 = arith.constant 0 : index
      %c0_19 = arith.constant 0 : index
      %22 = vector.load %arg8[%c0_18, %c0_19] : memref<1x128xf32, #tpu.memory_space<vmem>>, vector<1x128xf32>
      %23 = vector.broadcast %22 : vector<1x128xf32> to vector<8x128xf32>
      %24 = arith.addf %21, %23 : vector<8x128xf32>
      %c0_20 = arith.constant 0 : index
      %c0_21 = arith.constant 0 : index
      %25 = vector.load %arg12[%c0_20, %c0_21] : memref<8x128xf32, #tpu.memory_space<vmem>>, vector<8x128xf32>
      %26 = arith.addf %25, %24 : vector<8x128xf32>
      %c0_22 = arith.constant 0 : index
      %c0_23 = arith.constant 0 : index
      %27 = vector.load %arg9[%c0_22, %c0_23] : memref<1x128xf32, #tpu.memory_space<vmem>>, vector<1x128xf32>
      %c0_24 = arith.constant 0 : index
      %c0_25 = arith.constant 0 : index
      %28 = vector.load %arg10[%c0_24, %c0_25] : memref<1x128xf32, #tpu.memory_space<vmem>>, vector<1x128xf32>
      %cst_26 = arith.constant dense<0.000000e+00> : vector<8xf32>
      %29 = vector.multi_reduction <add>, %26, %cst_26 [1] : vector<8x128xf32> to vector<8xf32>
      %30 = vector.shape_cast %29 : vector<8xf32> to vector<8x1xf32>
      %cst_27 = arith.constant 3.125000e-02 : f32
      %31 = vector.broadcast %cst_27 : f32 to vector<8x1xf32>
      %32 = arith.mulf %30, %31 : vector<8x1xf32>
      %33 = arith.mulf %26, %26 : vector<8x128xf32>
      %cst_28 = arith.constant dense<0.000000e+00> : vector<8xf32>
      %34 = vector.multi_reduction <add>, %33, %cst_28 [1] : vector<8x128xf32> to vector<8xf32>
      %35 = vector.shape_cast %34 : vector<8xf32> to vector<8x1xf32>
      %cst_29 = arith.constant 3.125000e-02 : f32
      %36 = vector.broadcast %cst_29 : f32 to vector<8x1xf32>
      %37 = arith.mulf %35, %36 : vector<8x1xf32>
      %38 = arith.mulf %32, %32 : vector<8x1xf32>
      %39 = arith.subf %37, %38 : vector<8x1xf32>
      %40 = vector.broadcast %32 : vector<8x1xf32> to vector<8x128xf32>
      %41 = arith.subf %26, %40 : vector<8x128xf32>
      %cst_30 = arith.constant 9.99999974E-6 : f32
      %42 = vector.broadcast %cst_30 : f32 to vector<8x1xf32>
      %43 = arith.addf %39, %42 : vector<8x1xf32>
      %44 = math.rsqrt %43 : vector<8x1xf32>
      %45 = vector.broadcast %44 : vector<8x1xf32> to vector<8x128xf32>
      %46 = arith.mulf %41, %45 : vector<8x128xf32>
      %47 = vector.broadcast %27 : vector<1x128xf32> to vector<8x128xf32>
      %48 = arith.mulf %46, %47 : vector<8x128xf32>
      %49 = vector.broadcast %28 : vector<1x128xf32> to vector<8x128xf32>
      %50 = arith.addf %48, %49 : vector<8x128xf32>
      %c0_31 = arith.constant 0 : index
      %c0_32 = arith.constant 0 : index
      %51 = vector.load %arg11[%c0_31, %c0_32] : memref<8x128xf32, #tpu.memory_space<vmem>>, vector<8x128xf32>
      tpu.vector_store %arg11[%c0_31, %c0_32], %50 {strides = array<i32>} : memref<8x128xf32, #tpu.memory_space<vmem>>, vector<8x128xf32>,
    } else {
    }
    return
  }
  func.func @transform_0(%arg0: i32, %arg1: i32) -> (i32, i32) {
    %c0_i32 = arith.constant 0 : i32
    %c0_i32_0 = arith.constant 0 : i32
    return %arg0, %c0_i32 : i32, i32
  }
  func.func @transform_1(%arg0: i32, %arg1: i32) -> (i32, i32) {
    %c0_i32 = arith.constant 0 : i32
    %c0_i32_0 = arith.constant 0 : i32
    %c0_i32_1 = arith.constant 0 : i32
    return %c0_i32, %c0_i32_0 : i32, i32
  }
  func.func @transform_2(%arg0: i32, %arg1: i32) -> (i32, i32) {
    %c0_i32 = arith.constant 0 : i32
    %c0_i32_0 = arith.constant 0 : i32
    %c0_i32_1 = arith.constant 0 : i32
    return %c0_i32, %c0_i32_0 : i32, i32
  }
  func.func @transform_3(%arg0: i32, %arg1: i32) -> (i32, i32) {
    %c0_i32 = arith.constant 0 : i32
    %c0_i32_0 = arith.constant 0 : i32
    return %c0_i32, %arg1 : i32, i32
  }
  func.func @transform_4(%arg0: i32, %arg1: i32) -> (i32, i32) {
    %c0_i32 = arith.constant 0 : i32
    %c0_i32_0 = arith.constant 0 : i32
    return %c0_i32, %arg1 : i32, i32
  }
  func.func @transform_5(%arg0: i32, %arg1: i32) -> (i32, i32) {
    %c0_i32 = arith.constant 0 : i32
    %c0_i32_0 = arith.constant 0 : i32
    return %arg1, %c0_i32 : i32, i32
  }
  func.func @transform_6(%arg0: i32, %arg1: i32) -> (i32, i32) {
    %c0_i32 = arith.constant 0 : i32
    %c0_i32_0 = arith.constant 0 : i32
    %c0_i32_1 = arith.constant 0 : i32
    return %c0_i32, %c0_i32_0 : i32, i32
  }
  func.func @transform_7(%arg0: i32, %arg1: i32) -> (i32, i32) {
    %c0_i32 = arith.constant 0 : i32
    %c0_i32_0 = arith.constant 0 : i32
    %c0_i32_1 = arith.constant 0 : i32
    return %c0_i32, %c0_i32_0 : i32, i32
  }
  func.func @transform_8(%arg0: i32, %arg1: i32) -> (i32, i32) {
    %c0_i32 = arith.constant 0 : i32
    %c0_i32_0 = arith.constant 0 : i32
    %c0_i32_1 = arith.constant 0 : i32
    return %c0_i32, %c0_i32_0 : i32, i32
  }
  func.func @transform_9(%arg0: i32, %arg1: i32) -> (i32, i32) {
    %c0_i32 = arith.constant 0 : i32
    %c0_i32_0 = arith.constant 0 : i32
    return %arg0, %c0_i32 : i32, i32
  }
}

</mosaic_0001>

<llo_original>
// kernel: tpu_custom_call.1
$region0: #{tpu_custom_call.1}
  #allocation0 [shape = 'u32[]', space=smem, size = 0x4, offset = 0x4, fixed_abs, tag = 'smem constant byte address 0x4 - core index']
  #allocation1 [shape = 'u32[144,128]{1,0:T(1,128)}', space=vmem, size = 0x12000, scoped, tag = 'internal scratch']
  #allocation2 [shape = 'f32[8,128]{1,0:T(8,128)}', space=vmem, size = 0x1000, scoped, tag = 'scratch operand']
  #allocation3 [shape = 'f32[8,128]{1,0:T(8,128)}', space=vmem, size = 0x1000, scoped, tag = 'scratch operand']
  %s0 = inlined_call_operand.hbm [shape: bf16[16,128], index: 0, kind: input, shape index: {}]
  %s1 = inlined_call_operand.vmem [shape: f32[1,128], index: 1, kind: input, shape index: {}]
  %s2 = inlined_call_operand.vmem [shape: f32[1,128], index: 2, kind: input, shape index: {}]
  %s3 = inlined_call_operand.hbm [shape: bf16[128,128], index: 3, kind: input, shape index: {}]
  %s4 = inlined_call_operand.vmem [shape: f32[1,128], index: 4, kind: input, shape index: {}]
  %s5 = inlined_call_operand.hbm [shape: bf16[128,128], index: 5, kind: input, shape index: {}]
  %s6 = inlined_call_operand.vmem [shape: f32[1,128], index: 6, kind: input, shape index: {}]
  %s7 = inlined_call_operand.vmem [shape: f32[1,128], index: 7, kind: input, shape index: {}]
  %s8 = inlined_call_operand.vmem [shape: f32[1,128], index: 8, kind: input, shape index: {}]
  %s9 = inlined_call_operand.hbm [shape: f32[16,128], index: 9, kind: output, shape index: {}]
  %s10 = sld [smem:[#allocation0]]
  $region89: #{tpu_custom_call.1} parent=0
    _
  %s12 = ssub.s32 1, %s10
  %s13 = scalar_select 0, %s12, %s10
  $region1: #{tpu_custom_call.1} parent=0
    #allocation4 [shape = 'u8[4096]{0}', space=vmem, size = 0x1000, scoped, tag = 'input window, operand 0']
    #allocation5 [shape = 's32[2]{0}', space=sflag, size = 0x8, scoped, tag = 'scoped memory for tpu_custom_call.1']
    #allocation6 [shape = 's32[2]{0}', space=sflag, size = 0x8, scoped, tag = 'scoped memory for tpu_custom_call.1']
    #allocation7 [shape = 'u8[32768]{0}', space=vmem, size = 0x8000, scoped, tag = 'input window, operand 3, single buffered']
    #allocation8 [shape = 's32[1]{0}', space=sflag, size = 0x4, scoped, tag = 'scoped memory for tpu_custom_call.1']
    #allocation9 [shape = 'u8[32768]{0}', space=vmem, size = 0x8000, scoped, tag = 'input window, operand 5, single buffered']
    #allocation10 [shape = 'u8[8192]{0}', space=vmem, size = 0x2000, scoped, tag = 'output window, operand 0']
    %14 = vsyncpa [#allocation5], 0
    %s15 = scalar_lea.sflag [#allocation5], 1
    %16 = vsyncpa %s15, 0
    %17 = vsyncpa [#allocation8], 0
    %18 = vsyncpa [#allocation6], 0
    %s19 = scalar_lea.sflag [#allocation6], 1
    %20 = vsyncpa %s19, 0
    loop: start=0, step=1, limit=4
    $region2: #{tpu_custom_call.1} parent=1 // loop_pre_header
      _
    $region3: #{tpu_custom_call.1} parent=1 // loop_header
      %s22 = sphi 0, %s26
      %p23 = scmp.ge.s32.totalorder %s22, 4
      %s29 = sphi 0, %s41
      %s30 = sphi 0, %s37
      %s31 = sphi 0, %s29
      %s32 = sphi 0, %s30
      %s33 = sphi 0, %s31
      %s34 = sphi 0, %s32
      %s44 = sphi 0, %s46
      %s47 = sphi 0, %s44
      %s48 = sphi 0, %s47
      %s64 = sphi 0, %s48
      %s68 = sphi 0, %s68
      %s70 = sphi 0, %s68
      %s71 = sphi 0, %s70
      %s85 = sphi 0, %s71
      %s89 = sphi 0, %s89
      %s91 = sphi 0, %s89
      %s92 = sphi 0, %s91
      %s106 = sphi 0, %s92
      %s112 = sphi 0, %s114
      %s115 = sphi 0, %s112
      %s116 = sphi 0, %s115
      %s132 = sphi 0, %s116
      %s138 = sphi 0, %s140
      %s141 = sphi 0, %s138
      %s142 = sphi 0, %s141
      %s158 = sphi 0, %s142
      %s164 = sphi 0, %s166
      %s167 = sphi 0, %s164
      %s168 = sphi 0, %s167
      %s184 = sphi 0, %s168
      %s188 = sphi 0, %s188
      %s190 = sphi 0, %s188
      %s191 = sphi 0, %s190
      %s205 = sphi 0, %s191
      %s209 = sphi 0, %s209
      %s211 = sphi 0, %s209
      %s212 = sphi 0, %s211
      %s226 = sphi 0, %s212
      %s230 = sphi 0, %s230
      %s232 = sphi 0, %s230
      %s233 = sphi 0, %s232
      %s247 = sphi 0, %s233
      %s253 = sphi 0, %s255
      %s256 = sphi 0, %s253
      %s257 = sphi 0, %s256
      %s273 = sphi 0, %s257
    $region4: #{tpu_custom_call.1} parent=1 // loop_header_branch
      %25 = sbr.rel (%p23) target = $region8
    $region5: #{tpu_custom_call.1} parent=1 // loop_body
      %s27 = ssub.s32 %s22, 1
      %s28 = ssub.s32 %s22, 2
      %s35 = sadd.s32 1, %s30
      %p36 = scmp.ge.s32.totalorder %s35, 1
      %s37 = scalar_select %p36, 0, %s35
      %s38 = sadd.s32 1, %s29
      %s39 = scalar_select %p36, %s38, %s29
      %p40 = scmp.ge.s32.totalorder %s39, 2
      %s41 = scalar_select %p40, 0, %s39
      %s42 = ssub.s32 %s29, %s41
      %p43 = scmp.eq.s32.totalorder %s42, 0
      %s45 = sadd.s32 %s44, 1
      %s46 = scalar_select %p43, %s44, %s45
      %p49 = pneg %p43
      %p50 = scmp.eq.s32.totalorder %s22, 1
      %p51 = por %p49, %p50
      %p52 = scmp.ne.s32.totalorder %s44, %s47
      %p53 = scmp.eq.s32.totalorder %s22, 0
      %p54 = por %p52, %p53
      %p55 = scmp.ne.s32.totalorder %s44, %s47
      %p56 = scmp.eq.s32.totalorder %s27, 1
      %p57 = por %p55, %p56
      %p58 = scmp.ne.s32.totalorder %s47, %s48
      %p59 = scmp.eq.s32.totalorder %s27, 0
      %p60 = por %p58, %p59
      %p61 = scmp.ne.s32.totalorder %s47, %s48
      %p62 = scmp.eq.s32.totalorder %s28, 1
      %p63 = por %p61, %p62
      %p65 = scmp.ne.s32.totalorder %s48, %s64
      %p66 = scmp.eq.s32.totalorder %s28, 0
      %p67 = por %p65, %p66
      %s69 = sadd.s32 %s68, 1
      %p72 = scmp.eq.s32.totalorder %s22, 1
      %p73 = scmp.ne.s32.totalorder %s68, %s70
      %p74 = scmp.eq.s32.totalorder %s22, 0
      %p75 = por %p73, %p74
      %p76 = scmp.ne.s32.totalorder %s68, %s70
      %p77 = scmp.eq.s32.totalorder %s27, 1
      %p78 = por %p76, %p77
      %p79 = scmp.ne.s32.totalorder %s70, %s71
      %p80 = scmp.eq.s32.totalorder %s27, 0
      %p81 = por %p79, %p80
      %p82 = scmp.ne.s32.totalorder %s70, %s71
      %p83 = scmp.eq.s32.totalorder %s28, 1
      %p84 = por %p82, %p83
      %p86 = scmp.ne.s32.totalorder %s71, %s85
      %p87 = scmp.eq.s32.totalorder %s28, 0
      %p88 = por %p86, %p87
      %s90 = sadd.s32 %s89, 1
      %p93 = scmp.eq.s32.totalorder %s22, 1
      %p94 = scmp.ne.s32.totalorder %s89, %s91
      %p95 = scmp.eq.s32.totalorder %s22, 0
      %p96 = por %p94, %p95
      %p97 = scmp.ne.s32.totalorder %s89, %s91
      %p98 = scmp.eq.s32.totalorder %s27, 1
      %p99 = por %p97, %p98
      %p100 = scmp.ne.s32.totalorder %s91, %s92
      %p101 = scmp.eq.s32.totalorder %s27, 0
      %p102 = por %p100, %p101
      %p103 = scmp.ne.s32.totalorder %s91, %s92
      %p104 = scmp.eq.s32.totalorder %s28, 1
      %p105 = por %p103, %p104
      %p107 = scmp.ne.s32.totalorder %s92, %s106
      %p108 = scmp.eq.s32.totalorder %s28, 0
      %p109 = por %p107, %p108
      %s110 = ssub.s32 %s30, %s37
      %p111 = scmp.eq.s32.totalorder %s110, 0
      %s113 = sadd.s32 %s112, 1
      %s114 = scalar_select %p111, %s112, %s113
      %p117 = pneg %p111
      %p118 = scmp.eq.s32.totalorder %s22, 1
      %p119 = por %p117, %p118
      %p120 = scmp.ne.s32.totalorder %s112, %s115
      %p121 = scmp.eq.s32.totalorder %s22, 0
      %p122 = por %p120, %p121
      %p123 = scmp.ne.s32.totalorder %s112, %s115
      %p124 = scmp.eq.s32.totalorder %s27, 1
      %p125 = por %p123, %p124
      %p126 = scmp.ne.s32.totalorder %s115, %s116
      %p127 = scmp.eq.s32.totalorder %s27, 0
      %p128 = por %p126, %p127
      %p129 = scmp.ne.s32.totalorder %s115, %s116
      %p130 = scmp.eq.s32.totalorder %s28, 1
      %p131 = por %p129, %p130
      %p133 = scmp.ne.s32.totalorder %s116, %s132
      %p134 = scmp.eq.s32.totalorder %s28, 0
      %p135 = por %p133, %p134
      %s136 = ssub.s32 %s30, %s37
      %p137 = scmp.eq.s32.totalorder %s136, 0
      %s139 = sadd.s32 %s138, 1
      %s140 = scalar_select %p137, %s138, %s139
      %p143 = pneg %p137
      %p144 = scmp.eq.s32.totalorder %s22, 1
      %p145 = por %p143, %p144
      %p146 = scmp.ne.s32.totalorder %s138, %s141
      %p147 = scmp.eq.s32.totalorder %s22, 0
      %p148 = por %p146, %p147
      %p149 = scmp.ne.s32.totalorder %s138, %s141
      %p150 = scmp.eq.s32.totalorder %s27, 1
      %p151 = por %p149, %p150
      %p152 = scmp.ne.s32.totalorder %s141, %s142
      %p153 = scmp.eq.s32.totalorder %s27, 0
      %p154 = por %p152, %p153
      %p155 = scmp.ne.s32.totalorder %s141, %s142
      %p156 = scmp.eq.s32.totalorder %s28, 1
      %p157 = por %p155, %p156
      %p159 = scmp.ne.s32.totalorder %s142, %s158
      %p160 = scmp.eq.s32.totalorder %s28, 0
      %p161 = por %p159, %p160
      %s162 = ssub.s32 %s30, %s37
      %p163 = scmp.eq.s32.totalorder %s162, 0
      %s165 = sadd.s32 %s164, 1
      %s166 = scalar_select %p163, %s164, %s165
      %p169 = pneg %p163
      %p170 = scmp.eq.s32.totalorder %s22, 1
      %p171 = por %p169, %p170
      %p172 = scmp.ne.s32.totalorder %s164, %s167
      %p173 = scmp.eq.s32.totalorder %s22, 0
      %p174 = por %p172, %p173
      %p175 = scmp.ne.s32.totalorder %s164, %s167
      %p176 = scmp.eq.s32.totalorder %s27, 1
      %p177 = por %p175, %p176
      %p178 = scmp.ne.s32.totalorder %s167, %s168
      %p179 = scmp.eq.s32.totalorder %s27, 0
      %p180 = por %p178, %p179
      %p181 = scmp.ne.s32.totalorder %s167, %s168
      %p182 = scmp.eq.s32.totalorder %s28, 1
      %p183 = por %p181, %p182
      %p185 = scmp.ne.s32.totalorder %s168, %s184
      %p186 = scmp.eq.s32.totalorder %s28, 0
      %p187 = por %p185, %p186
      %s189 = sadd.s32 %s188, 1
      %p192 = scmp.eq.s32.totalorder %s22, 1
      %p193 = scmp.ne.s32.totalorder %s188, %s190
      %p194 = scmp.eq.s32.totalorder %s22, 0
      %p195 = por %p193, %p194
      %p196 = scmp.ne.s32.totalorder %s188, %s190
      %p197 = scmp.eq.s32.totalorder %s27, 1
      %p198 = por %p196, %p197
      %p199 = scmp.ne.s32.totalorder %s190, %s191
      %p200 = scmp.eq.s32.totalorder %s27, 0
      %p201 = por %p199, %p200
      %p202 = scmp.ne.s32.totalorder %s190, %s191
      %p203 = scmp.eq.s32.totalorder %s28, 1
      %p204 = por %p202, %p203
      %p206 = scmp.ne.s32.totalorder %s191, %s205
      %p207 = scmp.eq.s32.totalorder %s28, 0
      %p208 = por %p206, %p207
      %s210 = sadd.s32 %s209, 1
      %p213 = scmp.eq.s32.totalorder %s22, 1
      %p214 = scmp.ne.s32.totalorder %s209, %s211
      %p215 = scmp.eq.s32.totalorder %s22, 0
      %p216 = por %p214, %p215
      %p217 = scmp.ne.s32.totalorder %s209, %s211
      %p218 = scmp.eq.s32.totalorder %s27, 1
      %p219 = por %p217, %p218
      %p220 = scmp.ne.s32.totalorder %s211, %s212
      %p221 = scmp.eq.s32.totalorder %s27, 0
      %p222 = por %p220, %p221
      %p223 = scmp.ne.s32.totalorder %s211, %s212
      %p224 = scmp.eq.s32.totalorder %s28, 1
      %p225 = por %p223, %p224
      %p227 = scmp.ne.s32.totalorder %s212, %s226
      %p228 = scmp.eq.s32.totalorder %s28, 0
      %p229 = por %p227, %p228
      %s231 = sadd.s32 %s230, 1
      %p234 = scmp.eq.s32.totalorder %s22, 1
      %p235 = scmp.ne.s32.totalorder %s230, %s232
      %p236 = scmp.eq.s32.totalorder %s22, 0
      %p237 = por %p235, %p236
      %p238 = scmp.ne.s32.totalorder %s230, %s232
      %p239 = scmp.eq.s32.totalorder %s27, 1
      %p240 = por %p238, %p239
      %p241 = scmp.ne.s32.totalorder %s232, %s233
      %p242 = scmp.eq.s32.totalorder %s27, 0
      %p243 = por %p241, %p242
      %p244 = scmp.ne.s32.totalorder %s232, %s233
      %p245 = scmp.eq.s32.totalorder %s28, 1
      %p246 = por %p244, %p245
      %p248 = scmp.ne.s32.totalorder %s233, %s247
      %p249 = scmp.eq.s32.totalorder %s28, 0
      %p250 = por %p248, %p249
      %s251 = ssub.s32 %s29, %s41
      %p252 = scmp.eq.s32.totalorder %s251, 0
      %s254 = sadd.s32 %s253, 1
      %s255 = scalar_select %p252, %s253, %s254
      %p258 = pneg %p252
      %p259 = scmp.eq.s32.totalorder %s22, 1
      %p260 = por %p258, %p259
      %p261 = scmp.ne.s32.totalorder %s253, %s256
      %p262 = scmp.eq.s32.totalorder %s22, 0
      %p263 = por %p261, %p262
      %p264 = scmp.ne.s32.totalorder %s253, %s256
      %p265 = scmp.eq.s32.totalorder %s27, 1
      %p266 = por %p264, %p265
      %p267 = scmp.ne.s32.totalorder %s256, %s257
      %p268 = scmp.eq.s32.totalorder %s27, 0
      %p269 = por %p267, %p268
      %p270 = scmp.ne.s32.totalorder %s256, %s257
      %p271 = scmp.eq.s32.totalorder %s28, 1
      %p272 = por %p270, %p271
      %p274 = scmp.ne.s32.totalorder %s257, %s273
      %p275 = scmp.eq.s32.totalorder %s28, 0
      %p276 = por %p274, %p275
      %p277 = scmp.le.s32.totalorder 1, %s22
      %p278 = scmp.lt.s32.totalorder %s22, 3
      %p279 = pnand %p277, %p278
      %p280 = pneg %p279
      // Predicated region
      $region9: #{tpu_custom_call.1} parent=5 // pred_check
        _
      $region10: #{tpu_custom_call.1} parent=5 // pred_check_branch
        %282 = sbr.rel (%p279) target = $region12
      $region11: #{tpu_custom_call.1} parent=5 // pred_region
        %s283 = ssub.s32 %s22, 1
        // Predicated region
        $region13: #{tpu_custom_call.1} parent=11 // pred_check
          %p284 = pneg %p81
        $region14: #{tpu_custom_call.1} parent=11 // pred_check_branch
          %286 = sbr.rel (%p284) target = $region16
        $region15: #{tpu_custom_call.1} parent=11 // pred_region
          _
        $region16: #{tpu_custom_call.1} parent=11 // pred_fallthru
          _
        // Predicated region
        $region17: #{tpu_custom_call.1} parent=11 // pred_check
          %p287 = pneg %p102
        $region18: #{tpu_custom_call.1} parent=11 // pred_check_branch
          %289 = sbr.rel (%p287) target = $region20
        $region19: #{tpu_custom_call.1} parent=11 // pred_region
          _
        $region20: #{tpu_custom_call.1} parent=11 // pred_fallthru
          _
        // Predicated region
        $region21: #{tpu_custom_call.1} parent=11 // pred_check
          %p290 = pneg %p128
        $region22: #{tpu_custom_call.1} parent=11 // pred_check_branch
          %292 = sbr.rel (%p290) target = $region24
        $region23: #{tpu_custom_call.1} parent=11 // pred_region
          %s294 = ssub.s32 1024, 1024
          %295 = vsyncadd [#allocation8], %s294
          %s296 = smul.addr %s32, 64
          %s297 = scalar_lea.hbm %s3, %s296
          %s298 = sshll.u32 [#allocation7], 4
          %s299 = int_to_ptr.vmem [resolvable:$true] %s298
          %304 = dma.hbm_to_vmem [thread:$0]  %s297, 1024, %s299, [#allocation8], 64, 64, 4
        $region24: #{tpu_custom_call.1} parent=11 // pred_fallthru
          _
        // Predicated region
        $region25: #{tpu_custom_call.1} parent=11 // pred_check
          %p305 = pneg %p154
        $region26: #{tpu_custom_call.1} parent=11 // pred_check_branch
          %307 = sbr.rel (%p305) target = $region28
        $region27: #{tpu_custom_call.1} parent=11 // pred_region
          %p308 = scmp.lt.s32.totalorder %s32, 0
          %s309 = scalar_select %p308, %s32, 0
          %s310 = scalar_lea.vmem %s4, %s309
        $region28: #{tpu_custom_call.1} parent=11 // pred_fallthru
          _
        // Predicated region
        $region29: #{tpu_custom_call.1} parent=11 // pred_check
          %p311 = pneg %p180
        $region30: #{tpu_custom_call.1} parent=11 // pred_check_branch
          %313 = sbr.rel (%p311) target = $region32
        $region31: #{tpu_custom_call.1} parent=11 // pred_region
          %s314 = smul.u32 16, %s32
          %s316 = ssub.s32 1024, 1024
          %317 = vsyncadd [#allocation8], %s316
          %s318 = smul.addr %s314, 64
          %s319 = scalar_lea.hbm %s5, %s318
          %s320 = sshll.u32 [#allocation9], 4
          %s321 = int_to_ptr.vmem [resolvable:$true] %s320
          %326 = dma.hbm_to_vmem [thread:$0]  %s319, 1024, %s321, [#allocation8], 64, 64, 4
        $region32: #{tpu_custom_call.1} parent=11 // pred_fallthru
          _
        // Predicated region
        $region33: #{tpu_custom_call.1} parent=11 // pred_check
          %p327 = pneg %p201
        $region34: #{tpu_custom_call.1} parent=11 // pred_check_branch
          %329 = sbr.rel (%p327) target = $region36
        $region35: #{tpu_custom_call.1} parent=11 // pred_region
          _
        $region36: #{tpu_custom_call.1} parent=11 // pred_fallthru
          _
        // Predicated region
        $region37: #{tpu_custom_call.1} parent=11 // pred_check
          %p330 = pneg %p222
        $region38: #{tpu_custom_call.1} parent=11 // pred_check_branch
          %332 = sbr.rel (%p330) target = $region40
        $region39: #{tpu_custom_call.1} parent=11 // pred_region
          _
        $region40: #{tpu_custom_call.1} parent=11 // pred_fallthru
          _
        // Predicated region
        $region41: #{tpu_custom_call.1} parent=11 // pred_check
          %p333 = pneg %p243
        $region42: #{tpu_custom_call.1} parent=11 // pred_check_branch
          %335 = sbr.rel (%p333) target = $region44
        $region43: #{tpu_custom_call.1} parent=11 // pred_region
          _
        $region44: #{tpu_custom_call.1} parent=11 // pred_fallthru
          _
      $region12: #{tpu_custom_call.1} parent=5 // pred_fallthru
        _
      %p336 = scmp.lt.s32.totalorder %s22, 2
      // Predicated region
      $region45: #{tpu_custom_call.1} parent=5 // pred_check
        %p337 = pneg %p336
      $region46: #{tpu_custom_call.1} parent=5 // pred_check_branch
        %339 = sbr.rel (%p337) target = $region48
      $region47: #{tpu_custom_call.1} parent=5 // pred_region
        // Predicated region
        $region49: #{tpu_custom_call.1} parent=47 // pred_check
          %p340 = pneg %p54
        $region50: #{tpu_custom_call.1} parent=47 // pred_check_branch
          %342 = sbr.rel (%p340) target = $region52
        $region51: #{tpu_custom_call.1} parent=47 // pred_region
          %s343 = sand.u32 %s44, 1
          %s344 = scalar_lea.sflag [#allocation5], %s343
          %s345 = sand.u32 %s44, 1
          %s346 = smul.addr %s345, 4
          %s347 = scalar_lea.vmem [#allocation4], %s346
          %s349 = ssub.s32 64, 64
          %350 = vsyncadd %s344, %s349
          %s351 = smul.addr %s29, 64
          %s352 = scalar_lea.hbm %s0, %s351
          %s354 = sshll.u32 %s347, 4
          %s355 = int_to_ptr.vmem [resolvable:$true] %s354
          %357 = dma.hbm_to_vmem [thread:$0]  %s352, 64, %s355, %s344
        $region52: #{tpu_custom_call.1} parent=47 // pred_fallthru
          _
      $region48: #{tpu_custom_call.1} parent=5 // pred_fallthru
        _
      %p358 = scmp.le.s32.totalorder 1, %s22
      %p359 = scmp.lt.s32.totalorder %s22, 3
      %p360 = pnand %p358, %p359
      %p361 = pneg %p360
      // Predicated region
      $region53: #{tpu_custom_call.1} parent=5 // pred_check
        _
      $region54: #{tpu_custom_call.1} parent=5 // pred_check_branch
        %363 = sbr.rel (%p360) target = $region56
      $region55: #{tpu_custom_call.1} parent=5 // pred_region
        %s364 = ssub.s32 %s22, 1
        %s365 = sand.u32 %s47, 1
        %s366 = scalar_lea.sflag [#allocation5], %s365
        %s367 = sand.u32 %s47, 1
        %s368 = smul.addr %s367, 4
        %s369 = scalar_lea.vmem [#allocation4], %s368
        // Predicated region
        $region57: #{tpu_custom_call.1} parent=55 // pred_check
          %p370 = pneg %p60
        $region58: #{tpu_custom_call.1} parent=55 // pred_check_branch
          %372 = sbr.rel (%p370) target = $region60
        $region59: #{tpu_custom_call.1} parent=55 // pred_region
          %373 = dma.done %s366, 64
        $region60: #{tpu_custom_call.1} parent=55 // pred_fallthru
          _
        // Predicated region
        $region61: #{tpu_custom_call.1} parent=55 // pred_check
          %p374 = pneg %p128
        $region62: #{tpu_custom_call.1} parent=55 // pred_check_branch
          %376 = sbr.rel (%p374) target = $region64
        $region63: #{tpu_custom_call.1} parent=55 // pred_region
          %377 = dma.done [#allocation8], 1024
        $region64: #{tpu_custom_call.1} parent=55 // pred_fallthru
          _
        // Predicated region
        $region65: #{tpu_custom_call.1} parent=55 // pred_check
          %p378 = pneg %p180
        $region66: #{tpu_custom_call.1} parent=55 // pred_check_branch
          %380 = sbr.rel (%p378) target = $region68
        $region67: #{tpu_custom_call.1} parent=55 // pred_region
          %381 = dma.done [#allocation8], 1024
        $region68: #{tpu_custom_call.1} parent=55 // pred_fallthru
          _
        %s382 = sand.u32 %s47, 1
        %s383 = scalar_lea.sflag [#allocation5], %s382
        %s384 = sand.u32 %s47, 1
        %s385 = smul.addr %s384, 4
        %s386 = scalar_lea.vmem [#allocation4], %s385
        %p387 = pneg %p60
        %p388 = pneg %p57
        %p389 = pneg %p81
        %p390 = pneg %p78
        %p391 = pneg %p102
        %p392 = pneg %p99
        %p393 = pneg %p128
        %p394 = pneg %p125
        %p395 = scmp.lt.s32.totalorder %s32, 0
        %s396 = scalar_select %p395, %s32, 0
        %s397 = scalar_lea.vmem %s4, %s396
        %p398 = pneg %p154
        %p399 = pneg %p151
        %p400 = pneg %p180
        %p401 = pneg %p177
        %p402 = pneg %p201
        %p403 = pneg %p198
        %p404 = pneg %p222
        %p405 = pneg %p219
        %p406 = pneg %p243
        %p407 = pneg %p240
        %p408 = pneg %p269
        %p409 = pneg %p266
        %s410 = sand.u32 %s256, 1
        %s411 = scalar_lea.sflag [#allocation6], %s410
        %s412 = sand.u32 %s256, 1
        %s413 = smul.addr %s412, 8
        %s414 = scalar_lea.vmem [#allocation10], %s413
        %p415 = scmp.lt.s32.totalorder %s32, 0
        %s416 = scalar_select %p415, %s32, 0
        %s417 = scalar_lea.vmem %s4, %s416
        %s418 = smul.u32 16, %s32
        %p420 = scmp.eq.s32.totalorder %s32, 0
        // Predicated region
        $region69: #{tpu_custom_call.1} parent=55 // pred_check
          %p421 = pneg %p420
        $region70: #{tpu_custom_call.1} parent=55 // pred_check_branch
          %423 = sbr.rel (%p421) target = $region72
        $region71: #{tpu_custom_call.1} parent=55 // pred_region
          %v424 = vld [vmem:[%s369] sm:$0xf]
          %v425 = vunpack.c.l.bf16 %v424
          %v426 = vld [vmem:[%s1] sm:$0x1]
          %v427 = vld [vmem:[%s2] sm:$0x1]
          %428 = vadd.xlane.f32.xlu0 %v425
          %v429 = vpop.xlane.xlu0 %428
          %v430 = vmul.f32 %v429, 0.03125
          %v431 = vmul.f32 %v425, %v425
          %432 = vadd.xlane.f32.xlu0 %v431
          %v433 = vpop.xlane.xlu0 %432
          %v434 = vmul.f32 %v433, 0.03125
          %v435 = vmul.f32 %v430, %v430
          %v436 = vsub.f32 %v434, %v435
          %v437 = vsub.f32 %v425, %v430
          %v438 = vadd.f32 %v436, 1e-05
          %v439 = vrsqrt.pop %v438
          %v440 = vmul.f32 %v437, %v439
          %v442 = vlaneseq
          %v443 = vshrl.u32 %v442, 7
          %v444 = vsub.s32 0, %v443
          %v445 = vrot.slane %v426, %v444
          %v447 = vmul.f32 %v440, %v445
          %v449 = vlaneseq
          %v450 = vshrl.u32 %v449, 7
          %v451 = vsub.s32 0, %v450
          %v452 = vrot.slane %v427, %v451
          %v454 = vadd.f32 %v447, %v452
          %455 = vst [vmem:[#allocation2] sm:$0xff] %v454
          %456 = vst [vmem:[#allocation3] sm:$0xff] 0.0
        $region72: #{tpu_custom_call.1} parent=55 // pred_fallthru
          _
        %v457 = vld [vmem:[#allocation2] sm:$0xff]
        %v458 = vpack.c.bf16 %v457, %v457
        %v459 = vld [vmem:[#allocation7] sm:$0xf]
        %v460 = vld [vmem:[#allocation7 + $0x4] sm:$0xf]
        %v461 = vld [vmem:[#allocation7 + $0x8] sm:$0xf]
        %v462 = vld [vmem:[#allocation7 + $0xc] sm:$0xf]
        %v463 = vld [vmem:[#allocation7 + $0x10] sm:$0xf]
        %v464 = vld [vmem:[#allocation7 + $0x14] sm:$0xf]
        %v465 = vld [vmem:[#allocation7 + $0x18] sm:$0xf]
        %v466 = vld [vmem:[#allocation7 + $0x1c] sm:$0xf]
        %v467 = vld [vmem:[#allocation7 + $0x20] sm:$0xf]
        %v468 = vld [vmem:[#allocation7 + $0x24] sm:$0xf]
        %v469 = vld [vmem:[#allocation7 + $0x28] sm:$0xf]
        %v470 = vld [vmem:[#allocation7 + $0x2c] sm:$0xf]
        %v471 = vld [vmem:[#allocation7 + $0x30] sm:$0xf]
        %v472 = vld [vmem:[#allocation7 + $0x34] sm:$0xf]
        %v473 = vld [vmem:[#allocation7 + $0x38] sm:$0xf]
        %v474 = vld [vmem:[#allocation7 + $0x3c] sm:$0xf]
        %v475 = vld [vmem:[%s417] sm:$0x1]
        %v477 = vlaneseq
        %v478 = vshrl.u32 %v477, 7
        %v479 = vsub.s32 0, %v478
        %v480 = vrot.slane %v475, %v479
        %v498 = vunpack.c.l.b16 %v459
        %v499 = vunpack.c.l.b16 %v460
        %v500 = vunpack.c.l.b16 %v461
        %v501 = vunpack.c.l.b16 %v462
        %v502 = vunpack.c.l.b16 %v463
        %v503 = vunpack.c.l.b16 %v464
        %v504 = vunpack.c.l.b16 %v465
        %v505 = vunpack.c.l.b16 %v466
        %v506 = vunpack.c.l.b16 %v467
        %v507 = vunpack.c.l.b16 %v468
        %v508 = vunpack.c.l.b16 %v469
        %v509 = vunpack.c.l.b16 %v470
        %v510 = vunpack.c.l.b16 %v471
        %v511 = vunpack.c.l.b16 %v472
        %v512 = vunpack.c.l.b16 %v473
        %v513 = vunpack.c.l.b16 %v474
        %v514 = vpack.c.b16 %v499, %v498
        %v515 = vpack.c.b16 %v501, %v500
        %v516 = vpack.c.b16 %v503, %v502
        %v517 = vpack.c.b16 %v505, %v504
        %v518 = vpack.c.b16 %v507, %v506
        %v519 = vpack.c.b16 %v509, %v508
        %v520 = vpack.c.b16 %v511, %v510
        %v521 = vpack.c.b16 %v513, %v512
        %530 = vmatprep.subr.bf16.mxu0 0
        %531 = vmatpush1.bf16.msra.mxu0 %v521
        %532 = vmatprep.subr.bf16.mxu0 0
        %533 = vmatpush1.bf16.msra.mxu0 %v520
        %534 = vmatprep.subr.bf16.mxu0 0
        %535 = vmatpush1.bf16.msra.mxu0 %v519
        %536 = vmatprep.subr.bf16.mxu0 0
        %537 = vmatpush1.bf16.msra.mxu0 %v518
        %538 = vmatprep.subr.bf16.mxu0 0
        %539 = vmatpush1.bf16.msra.mxu0 %v517
        %540 = vmatprep.subr.bf16.mxu0 0
        %541 = vmatpush1.bf16.msra.mxu0 %v516
        %542 = vmatprep.subr.bf16.mxu0 0
        %543 = vmatpush1.bf16.msra.mxu0 %v515
        %544 = vmatprep.subr.bf16.mxu0 0
        %545 = vmatpush1.bf16.msra.mxu0 %v514
        %546 = vmatprep.subr.bf16.mxu0 0
        %547 = vmatpush2.bf16.msra.mxu0 0
        %548 = vmatprep.subr.bf16.mxu0 0
        %549 = vmatpush2.bf16.msra.mxu0 0
        %550 = vmatprep.subr.bf16.mxu0 0
        %551 = vmatpush2.bf16.msra.mxu0 0
        %552 = vmatprep.subr.bf16.mxu0 0
        %553 = vmatpush2.bf16.msra.mxu0 0
        %554 = vmatprep.subr.bf16.mxu0 0
        %555 = vmatpush2.bf16.msra.mxu0 0
        %556 = vmatprep.subr.bf16.mxu0 0
        %557 = vmatpush2.bf16.msra.mxu0 0
        %558 = vmatprep.subr.bf16.mxu0 0
        %559 = vmatpush2.bf16.msra.mxu0 0
        %560 = vmatprep.subr.bf16.mxu0 0
        %561 = vmatpush2.bf16.msra.mxu0 0
        %562 = vmatprep.mubr.bf16.mxu0 0
        %563 = vmatmul.mubr.bf16.gmra.mxu0 %v458
        %v564 = vpop.f32.mrf.mxu0
        %v565 = vadd.f32 %v480, %v564
        %v566 = vpop.f32.mrf.mxu0
        %v567 = vpop.f32.mrf.mxu0
        %v568 = vpop.f32.mrf.mxu0
        %569 = vdwg.mxu0
        %v570 = vmax.f32 %v565, 0.0
        %v571 = vld [vmem:[#allocation3] sm:$0xff]
        %v572 = vpack.c.bf16 %v570, %v570
        %v573 = vld [vmem:[#allocation9] sm:$0xf]
        %v574 = vld [vmem:[#allocation9 + $0x4] sm:$0xf]
        %v575 = vld [vmem:[#allocation9 + $0x8] sm:$0xf]
        %v576 = vld [vmem:[#allocation9 + $0xc] sm:$0xf]
        %v577 = vld [vmem:[#allocation9 + $0x10] sm:$0xf]
        %v578 = vld [vmem:[#allocation9 + $0x14] sm:$0xf]
        %v579 = vld [vmem:[#allocation9 + $0x18] sm:$0xf]
        %v580 = vld [vmem:[#allocation9 + $0x1c] sm:$0xf]
        %v581 = vld [vmem:[#allocation9 + $0x20] sm:$0xf]
        %v582 = vld [vmem:[#allocation9 + $0x24] sm:$0xf]
        %v583 = vld [vmem:[#allocation9 + $0x28] sm:$0xf]
        %v584 = vld [vmem:[#allocation9 + $0x2c] sm:$0xf]
        %v585 = vld [vmem:[#allocation9 + $0x30] sm:$0xf]
        %v586 = vld [vmem:[#allocation9 + $0x34] sm:$0xf]
        %v587 = vld [vmem:[#allocation9 + $0x38] sm:$0xf]
        %v588 = vld [vmem:[#allocation9 + $0x3c] sm:$0xf]
        %v605 = vunpack.c.l.b16 %v573
        %v606 = vunpack.c.l.b16 %v574
        %v607 = vunpack.c.l.b16 %v575
        %v608 = vunpack.c.l.b16 %v576
        %v609 = vunpack.c.l.b16 %v577
        %v610 = vunpack.c.l.b16 %v578
        %v611 = vunpack.c.l.b16 %v579
        %v612 = vunpack.c.l.b16 %v580
        %v613 = vunpack.c.l.b16 %v581
        %v614 = vunpack.c.l.b16 %v582
        %v615 = vunpack.c.l.b16 %v583
        %v616 = vunpack.c.l.b16 %v584
        %v617 = vunpack.c.l.b16 %v585
        %v618 = vunpack.c.l.b16 %v586
        %v619 = vunpack.c.l.b16 %v587
        %v620 = vunpack.c.l.b16 %v588
        %v621 = vpack.c.b16 %v606, %v605
        %v622 = vpack.c.b16 %v608, %v607
        %v623 = vpack.c.b16 %v610, %v609
        %v624 = vpack.c.b16 %v612, %v611
        %v625 = vpack.c.b16 %v614, %v613
        %v626 = vpack.c.b16 %v616, %v615
        %v627 = vpack.c.b16 %v618, %v617
        %v628 = vpack.c.b16 %v620, %v619
        %637 = vmatprep.subr.bf16.mxu0 0
        %638 = vmatpush1.bf16.msra.mxu0 %v628
        %639 = vmatprep.subr.bf16.mxu0 0
        %640 = vmatpush1.bf16.msra.mxu0 %v627
        %641 = vmatprep.subr.bf16.mxu0 0
        %642 = vmatpush1.bf16.msra.mxu0 %v626
        %643 = vmatprep.subr.bf16.mxu0 0
        %644 = vmatpush1.bf16.msra.mxu0 %v625
        %645 = vmatprep.subr.bf16.mxu0 0
        %646 = vmatpush1.bf16.msra.mxu0 %v624
        %647 = vmatprep.subr.bf16.mxu0 0
        %648 = vmatpush1.bf16.msra.mxu0 %v623
        %649 = vmatprep.subr.bf16.mxu0 0
        %650 = vmatpush1.bf16.msra.mxu0 %v622
        %651 = vmatprep.subr.bf16.mxu0 0
        %652 = vmatpush1.bf16.msra.mxu0 %v621
        %653 = vmatprep.subr.bf16.mxu0 0
        %654 = vmatpush2.bf16.msra.mxu0 0
        %655 = vmatprep.subr.bf16.mxu0 0
        %656 = vmatpush2.bf16.msra.mxu0 0
        %657 = vmatprep.subr.bf16.mxu0 0
        %658 = vmatpush2.bf16.msra.mxu0 0
        %659 = vmatprep.subr.bf16.mxu0 0
        %660 = vmatpush2.bf16.msra.mxu0 0
        %661 = vmatprep.subr.bf16.mxu0 0
        %662 = vmatpush2.bf16.msra.mxu0 0
        %663 = vmatprep.subr.bf16.mxu0 0
        %664 = vmatpush2.bf16.msra.mxu0 0
        %665 = vmatprep.subr.bf16.mxu0 0
        %666 = vmatpush2.bf16.msra.mxu0 0
        %667 = vmatprep.subr.bf16.mxu0 0
        %668 = vmatpush2.bf16.msra.mxu0 0
        %669 = vmatprep.mubr.bf16.mxu0 0
        %670 = vmatmul.mubr.bf16.gmra.mxu0 %v572
        %v671 = vpop.f32.mrf.mxu0
        %v672 = vadd.f32 0.0, %v671
        %v673 = vpop.f32.mrf.mxu0
        %v674 = vpop.f32.mrf.mxu0
        %v675 = vpop.f32.mrf.mxu0
        %676 = vdwg.mxu0
        %v677 = vadd.f32 %v571, %v672
        %678 = vst [vmem:[#allocation3] sm:$0xff] %v677
        // Predicated region
        $region73: #{tpu_custom_call.1} parent=55 // pred_check
          %p679 = pneg %p420
        $region74: #{tpu_custom_call.1} parent=55 // pred_check_branch
          %681 = sbr.rel (%p679) target = $region76
        $region75: #{tpu_custom_call.1} parent=55 // pred_region
          %v682 = vld [vmem:[#allocation3] sm:$0xff]
          %v683 = vld [vmem:[%s6] sm:$0x1]
          %v685 = vlaneseq
          %v686 = vshrl.u32 %v685, 7
          %v687 = vsub.s32 0, %v686
          %v688 = vrot.slane %v683, %v687
          %v690 = vadd.f32 %v682, %v688
          %v691 = vld [vmem:[#allocation2] sm:$0xff]
          %v692 = vadd.f32 %v691, %v690
          %v693 = vld [vmem:[%s7] sm:$0x1]
          %v694 = vld [vmem:[%s8] sm:$0x1]
          %695 = vadd.xlane.f32.xlu0 %v692
          %v696 = vpop.xlane.xlu0 %695
          %v697 = vmul.f32 %v696, 0.03125
          %v698 = vmul.f32 %v692, %v692
          %699 = vadd.xlane.f32.xlu0 %v698
          %v700 = vpop.xlane.xlu0 %699
          %v701 = vmul.f32 %v700, 0.03125
          %v702 = vmul.f32 %v697, %v697
          %v703 = vsub.f32 %v701, %v702
          %v704 = vsub.f32 %v692, %v697
          %v705 = vadd.f32 %v703, 1e-05
          %v706 = vrsqrt.pop %v705
          %v707 = vmul.f32 %v704, %v706
          %v709 = vlaneseq
          %v710 = vshrl.u32 %v709, 7
          %v711 = vsub.s32 0, %v710
          %v712 = vrot.slane %v693, %v711
          %v714 = vmul.f32 %v707, %v712
          %v716 = vlaneseq
          %v717 = vshrl.u32 %v716, 7
          %v718 = vsub.s32 0, %v717
          %v719 = vrot.slane %v694, %v718
          %v721 = vadd.f32 %v714, %v719
          %722 = vst [vmem:[%s414] sm:$0xff] %v721
        $region76: #{tpu_custom_call.1} parent=55 // pred_fallthru
          _
        %s723 = sand.u32 %s256, 1
        %s724 = scalar_lea.sflag [#allocation6], %s723
        %s725 = sand.u32 %s256, 1
        %s726 = smul.addr %s725, 8
        %s727 = scalar_lea.vmem [#allocation10], %s726
        // Predicated region
        $region77: #{tpu_custom_call.1} parent=55 // pred_check
          %p728 = pneg %p266
        $region78: #{tpu_custom_call.1} parent=55 // pred_check_branch
          %730 = sbr.rel (%p728) target = $region80
        $region79: #{tpu_custom_call.1} parent=55 // pred_region
          %s732 = ssub.s32 128, 128
          %733 = vsyncadd %s724, %s732
          %s734 = smul.addr %s31, 128
          %s735 = scalar_lea.hbm %s9, %s734
          %s737 = sshll.u32 %s727, 4
          %s738 = int_to_ptr.vmem [resolvable:$true] %s737
          %740 = dma.vmem_to_hbm [thread:$0]  %s738, 128, %s735, %s724
        $region80: #{tpu_custom_call.1} parent=55 // pred_fallthru
          _
      $region56: #{tpu_custom_call.1} parent=5 // pred_fallthru
        _
      %p741 = scmp.le.s32.totalorder 2, %s22
      // Predicated region
      $region81: #{tpu_custom_call.1} parent=5 // pred_check
        %p742 = pneg %p741
      $region82: #{tpu_custom_call.1} parent=5 // pred_check_branch
        %744 = sbr.rel (%p742) target = $region84
      $region83: #{tpu_custom_call.1} parent=5 // pred_region
        %s745 = ssub.s32 %s22, 2
        // Predicated region
        $region85: #{tpu_custom_call.1} parent=83 // pred_check
          %p746 = pneg %p272
        $region86: #{tpu_custom_call.1} parent=83 // pred_check_branch
          %748 = sbr.rel (%p746) target = $region88
        $region87: #{tpu_custom_call.1} parent=83 // pred_region
          %s749 = sand.u32 %s257, 1
          %s750 = scalar_lea.sflag [#allocation6], %s749
          %s751 = sand.u32 %s257, 1
          %s752 = smul.addr %s751, 8
          %s753 = scalar_lea.vmem [#allocation10], %s752
          %754 = dma.done %s750, 128
        $region88: #{tpu_custom_call.1} parent=83 // pred_fallthru
          _
      $region84: #{tpu_custom_call.1} parent=5 // pred_fallthru
        _
    $region6: #{tpu_custom_call.1} parent=1 // loop_footer
      %s26 = sadd.s32 1, %s22
    $region7: #{tpu_custom_call.1} parent=1 // loop_footer_branch
      %21 = sbr.rel target = $region3
    $region8: #{tpu_custom_call.1} parent=1 // loop_exit
      _
    %755 = vsyncpa [#allocation5], 1
    %s756 = scalar_lea.sflag [#allocation5], 1
    %757 = vsyncpa %s756, 1
    %758 = vsyncpa [#allocation8], 1
    %759 = vsyncpa [#allocation6], 1
    %s760 = scalar_lea.sflag [#allocation6], 1
    %761 = vsyncpa %s760, 1

// kernel: tpu_custom_call.1
$region0: #{tpu_custom_call.1}
  #allocation0 [shape = 'u32[]', space=smem, size = 0x4, offset = 0x4, fixed_abs, tag = 'smem constant byte address 0x4 - core index']
  #allocation1 [shape = 'u32[144,128]{1,0:T(1,128)}', space=vmem, size = 0x12000, scoped, tag = 'internal scratch']
  #allocation2 [shape = 'f32[8,128]{1,0:T(8,128)}', space=vmem, size = 0x1000, scoped, tag = 'scratch operand']
  #allocation3 [shape = 'f32[8,128]{1,0:T(8,128)}', space=vmem, size = 0x1000, scoped, tag = 'scratch operand']
  %s0 = inlined_call_operand.hbm [shape: bf16[16,128], index: 0, kind: input, shape index: {}]
  %s1 = inlined_call_operand.vmem [shape: f32[1,128], index: 1, kind: input, shape index: {}]
  %s2 = inlined_call_operand.vmem [shape: f32[1,128], index: 2, kind: input, shape index: {}]
  %s3 = inlined_call_operand.hbm [shape: bf16[128,128], index: 3, kind: input, shape index: {}]
  %s4 = inlined_call_operand.vmem [shape: f32[1,128], index: 4, kind: input, shape index: {}]
  %s5 = inlined_call_operand.hbm [shape: bf16[128,128], index: 5, kind: input, shape index: {}]
  %s6 = inlined_call_operand.vmem [shape: f32[1,128], index: 6, kind: input, shape index: {}]
  %s7 = inlined_call_operand.vmem [shape: f32[1,128], index: 7, kind: input, shape index: {}]
  %s8 = inlined_call_operand.vmem [shape: f32[1,128], index: 8, kind: input, shape index: {}]
  %s9 = inlined_call_operand.hbm [shape: f32[16,128], index: 9, kind: output, shape index: {}]
  %s10 = sld [smem:[#allocation0]]
  $region89: #{tpu_custom_call.1} parent=0
    _
  %s12 = ssub.s32 1, %s10
  %s13 = scalar_select 0, %s12, %s10
  $region1: #{tpu_custom_call.1} parent=0
    #allocation4 [shape = 'u8[4096]{0}', space=vmem, size = 0x1000, scoped, tag = 'input window, operand 0']
    #allocation5 [shape = 's32[2]{0}', space=sflag, size = 0x8, scoped, tag = 'scoped memory for tpu_custom_call.1']
    #allocation6 [shape = 's32[2]{0}', space=sflag, size = 0x8, scoped, tag = 'scoped memory for tpu_custom_call.1']
    #allocation7 [shape = 'u8[32768]{0}', space=vmem, size = 0x8000, scoped, tag = 'input window, operand 3, single buffered']
    #allocation8 [shape = 's32[1]{0}', space=sflag, size = 0x4, scoped, tag = 'scoped memory for tpu_custom_call.1']
    #allocation9 [shape = 'u8[32768]{0}', space=vmem, size = 0x8000, scoped, tag = 'input window, operand 5, single buffered']
    #allocation10 [shape = 'u8[8192]{0}', space=vmem, size = 0x2000, scoped, tag = 'output window, operand 0']
    %14 = vsyncpa [#allocation5], 0
    %s15 = scalar_lea.sflag [#allocation5], 1
    %16 = vsyncpa %s15, 0
    %17 = vsyncpa [#allocation8], 0
    %18 = vsyncpa [#allocation6], 0
    %s19 = scalar_lea.sflag [#allocation6], 1
    %20 = vsyncpa %s19, 0
    loop: start=0, step=1, limit=4
    $region2: #{tpu_custom_call.1} parent=1 // loop_pre_header
      _
    $region3: #{tpu_custom_call.1} parent=1 // loop_header
      %s22 = sphi 0, %s26
      %p23 = scmp.ge.s32.totalorder %s22, 4
      %s29 = sphi 0, %s41
      %s30 = sphi 0, %s37
      %s31 = sphi 0, %s29
      %s32 = sphi 0, %s30
      %s33 = sphi 0, %s31
      %s34 = sphi 0, %s32
      %s44 = sphi 0, %s46
      %s47 = sphi 0, %s44
      %s48 = sphi 0, %s47
      %s64 = sphi 0, %s48
      %s68 = sphi 0, %s68
      %s70 = sphi 0, %s68
      %s71 = sphi 0, %s70
      %s85 = sphi 0, %s71
      %s89 = sphi 0, %s89
      %s91 = sphi 0, %s89
      %s92 = sphi 0, %s91
      %s106 = sphi 0, %s92
      %s112 = sphi 0, %s114
      %s115 = sphi 0, %s112
      %s116 = sphi 0, %s115
      %s132 = sphi 0, %s116
      %s138 = sphi 0, %s140
      %s141 = sphi 0, %s138
      %s142 = sphi 0, %s141
      %s158 = sphi 0, %s142
      %s164 = sphi 0, %s166
      %s167 = sphi 0, %s164
      %s168 = sphi 0, %s167
      %s184 = sphi 0, %s168
      %s188 = sphi 0, %s188
      %s190 = sphi 0, %s188
      %s191 = sphi 0, %s190
      %s205 = sphi 0, %s191
      %s209 = sphi 0, %s209
      %s211 = sphi 0, %s209
      %s212 = sphi 0, %s211
      %s226 = sphi 0, %s212
      %s230 = sphi 0, %s230
      %s232 = sphi 0, %s230
      %s233 = sphi 0, %s232
      %s247 = sphi 0, %s233
      %s253 = sphi 0, %s255
      %s256 = sphi 0, %s253
      %s257 = sphi 0, %s256
      %s273 = sphi 0, %s257
    $region4: #{tpu_custom_call.1} parent=1 // loop_header_branch
      %25 = sbr.rel (%p23) target = $region8
    $region5: #{tpu_custom_call.1} parent=1 // loop_body
      %s27 = ssub.s32 %s22, 1
      %s28 = ssub.s32 %s22, 2
      %s35 = sadd.s32 1, %s30
      %p36 = scmp.ge.s32.totalorder %s35, 1
      %s37 = scalar_select %p36, 0, %s35
      %s38 = sadd.s32 1, %s29
      %s39 = scalar_select %p36, %s38, %s29
      %p40 = scmp.ge.s32.totalorder %s39, 2
      %s41 = scalar_select %p40, 0, %s39
      %s42 = ssub.s32 %s29, %s41
      %p43 = scmp.eq.s32.totalorder %s42, 0
      %s45 = sadd.s32 %s44, 1
      %s46 = scalar_select %p43, %s44, %s45
      %p49 = pneg %p43
      %p50 = scmp.eq.s32.totalorder %s22, 1
      %p51 = por %p49, %p50
      %p52 = scmp.ne.s32.totalorder %s44, %s47
      %p53 = scmp.eq.s32.totalorder %s22, 0
      %p54 = por %p52, %p53
      %p55 = scmp.ne.s32.totalorder %s44, %s47
      %p56 = scmp.eq.s32.totalorder %s27, 1
      %p57 = por %p55, %p56
      %p58 = scmp.ne.s32.totalorder %s47, %s48
      %p59 = scmp.eq.s32.totalorder %s27, 0
      %p60 = por %p58, %p59
      %p61 = scmp.ne.s32.totalorder %s47, %s48
      %p62 = scmp.eq.s32.totalorder %s28, 1
      %p63 = por %p61, %p62
      %p65 = scmp.ne.s32.totalorder %s48, %s64
      %p66 = scmp.eq.s32.totalorder %s28, 0
      %p67 = por %p65, %p66
      %s69 = sadd.s32 %s68, 1
      %p72 = scmp.eq.s32.totalorder %s22, 1
      %p73 = scmp.ne.s32.totalorder %s68, %s70
      %p74 = scmp.eq.s32.totalorder %s22, 0
      %p75 = por %p73, %p74
      %p76 = scmp.ne.s32.totalorder %s68, %s70
      %p77 = scmp.eq.s32.totalorder %s27, 1
      %p78 = por %p76, %p77
      %p79 = scmp.ne.s32.totalorder %s70, %s71
      %p80 = scmp.eq.s32.totalorder %s27, 0
      %p81 = por %p79, %p80
      %p82 = scmp.ne.s32.totalorder %s70, %s71
      %p83 = scmp.eq.s32.totalorder %s28, 1
      %p84 = por %p82, %p83
      %p86 = scmp.ne.s32.totalorder %s71, %s85
      %p87 = scmp.eq.s32.totalorder %s28, 0
      %p88 = por %p86, %p87
      %s90 = sadd.s32 %s89, 1
      %p93 = scmp.eq.s32.totalorder %s22, 1
      %p94 = scmp.ne.s32.totalorder %s89, %s91
      %p95 = scmp.eq.s32.totalorder %s22, 0
      %p96 = por %p94, %p95
      %p97 = scmp.ne.s32.totalorder %s89, %s91
      %p98 = scmp.eq.s32.totalorder %s27, 1
      %p99 = por %p97, %p98
      %p100 = scmp.ne.s32.totalorder %s91, %s92
      %p101 = scmp.eq.s32.totalorder %s27, 0
      %p102 = por %p100, %p101
      %p103 = scmp.ne.s32.totalorder %s91, %s92
      %p104 = scmp.eq.s32.totalorder %s28, 1
      %p105 = por %p103, %p104
      %p107 = scmp.ne.s32.totalorder %s92, %s106
      %p108 = scmp.eq.s32.totalorder %s28, 0
      %p109 = por %p107, %p108
      %s110 = ssub.s32 %s30, %s37
      %p111 = scmp.eq.s32.totalorder %s110, 0
      %s113 = sadd.s32 %s112, 1
      %s114 = scalar_select %p111, %s112, %s113
      %p117 = pneg %p111
      %p118 = scmp.eq.s32.totalorder %s22, 1
      %p119 = por %p117, %p118
      %p120 = scmp.ne.s32.totalorder %s112, %s115
      %p121 = scmp.eq.s32.totalorder %s22, 0
      %p122 = por %p120, %p121
      %p123 = scmp.ne.s32.totalorder %s112, %s115
      %p124 = scmp.eq.s32.totalorder %s27, 1
      %p125 = por %p123, %p124
      %p126 = scmp.ne.s32.totalorder %s115, %s116
      %p127 = scmp.eq.s32.totalorder %s27, 0
      %p128 = por %p126, %p127
      %p129 = scmp.ne.s32.totalorder %s115, %s116
      %p130 = scmp.eq.s32.totalorder %s28, 1
      %p131 = por %p129, %p130
      %p133 = scmp.ne.s32.totalorder %s116, %s132
      %p134 = scmp.eq.s32.totalorder %s28, 0
      %p135 = por %p133, %p134
      %s136 = ssub.s32 %s30, %s37
      %p137 = scmp.eq.s32.totalorder %s136, 0
      %s139 = sadd.s32 %s138, 1
      %s140 = scalar_select %p137, %s138, %s139
      %p143 = pneg %p137
      %p144 = scmp.eq.s32.totalorder %s22, 1
      %p145 = por %p143, %p144
      %p146 = scmp.ne.s32.totalorder %s138, %s141
      %p147 = scmp.eq.s32.totalorder %s22, 0
      %p148 = por %p146, %p147
      %p149 = scmp.ne.s32.totalorder %s138, %s141
      %p150 = scmp.eq.s32.totalorder %s27, 1
      %p151 = por %p149, %p150
      %p152 = scmp.ne.s32.totalorder %s141, %s142
      %p153 = scmp.eq.s32.totalorder %s27, 0
      %p154 = por %p152, %p153
      %p155 = scmp.ne.s32.totalorder %s141, %s142
      %p156 = scmp.eq.s32.totalorder %s28, 1
      %p157 = por %p155, %p156
      %p159 = scmp.ne.s32.totalorder %s142, %s158
      %p160 = scmp.eq.s32.totalorder %s28, 0
      %p161 = por %p159, %p160
      %s162 = ssub.s32 %s30, %s37
      %p163 = scmp.eq.s32.totalorder %s162, 0
      %s165 = sadd.s32 %s164, 1
      %s166 = scalar_select %p163, %s164, %s165
      %p169 = pneg %p163
      %p170 = scmp.eq.s32.totalorder %s22, 1
      %p171 = por %p169, %p170
      %p172 = scmp.ne.s32.totalorder %s164, %s167
      %p173 = scmp.eq.s32.totalorder %s22, 0
      %p174 = por %p172, %p173
      %p175 = scmp.ne.s32.totalorder %s164, %s167
      %p176 = scmp.eq.s32.totalorder %s27, 1
      %p177 = por %p175, %p176
      %p178 = scmp.ne.s32.totalorder %s167, %s168
      %p179 = scmp.eq.s32.totalorder %s27, 0
      %p180 = por %p178, %p179
      %p181 = scmp.ne.s32.totalorder %s167, %s168
      %p182 = scmp.eq.s32.totalorder %s28, 1
      %p183 = por %p181, %p182
      %p185 = scmp.ne.s32.totalorder %s168, %s184
      %p186 = scmp.eq.s32.totalorder %s28, 0
      %p187 = por %p185, %p186
      %s189 = sadd.s32 %s188, 1
      %p192 = scmp.eq.s32.totalorder %s22, 1
      %p193 = scmp.ne.s32.totalorder %s188, %s190
      %p194 = scmp.eq.s32.totalorder %s22, 0
      %p195 = por %p193, %p194
      %p196 = scmp.ne.s32.totalorder %s188, %s190
      %p197 = scmp.eq.s32.totalorder %s27, 1
      %p198 = por %p196, %p197
      %p199 = scmp.ne.s32.totalorder %s190, %s191
      %p200 = scmp.eq.s32.totalorder %s27, 0
      %p201 = por %p199, %p200
      %p202 = scmp.ne.s32.totalorder %s190, %s191
      %p203 = scmp.eq.s32.totalorder %s28, 1
      %p204 = por %p202, %p203
      %p206 = scmp.ne.s32.totalorder %s191, %s205
      %p207 = scmp.eq.s32.totalorder %s28, 0
      %p208 = por %p206, %p207
      %s210 = sadd.s32 %s209, 1
      %p213 = scmp.eq.s32.totalorder %s22, 1
      %p214 = scmp.ne.s32.totalorder %s209, %s211
      %p215 = scmp.eq.s32.totalorder %s22, 0
      %p216 = por %p214, %p215
      %p217 = scmp.ne.s32.totalorder %s209, %s211
      %p218 = scmp.eq.s32.totalorder %s27, 1
      %p219 = por %p217, %p218
      %p220 = scmp.ne.s32.totalorder %s211, %s212
      %p221 = scmp.eq.s32.totalorder %s27, 0
      %p222 = por %p220, %p221
      %p223 = scmp.ne.s32.totalorder %s211, %s212
      %p224 = scmp.eq.s32.totalorder %s28, 1
      %p225 = por %p223, %p224
      %p227 = scmp.ne.s32.totalorder %s212, %s226
      %p228 = scmp.eq.s32.totalorder %s28, 0
      %p229 = por %p227, %p228
      %s231 = sadd.s32 %s230, 1
      %p234 = scmp.eq.s32.totalorder %s22, 1
      %p235 = scmp.ne.s32.totalorder %s230, %s232
      %p236 = scmp.eq.s32.totalorder %s22, 0
      %p237 = por %p235, %p236
      %p238 = scmp.ne.s32.totalorder %s230, %s232
      %p239 = scmp.eq.s32.totalorder %s27, 1
      %p240 = por %p238, %p239
      %p241 = scmp.ne.s32.totalorder %s232, %s233
      %p242 = scmp.eq.s32.totalorder %s27, 0
      %p243 = por %p241, %p242
      %p244 = scmp.ne.s32.totalorder %s232, %s233
      %p245 = scmp.eq.s32.totalorder %s28, 1
      %p246 = por %p244, %p245
      %p248 = scmp.ne.s32.totalorder %s233, %s247
      %p249 = scmp.eq.s32.totalorder %s28, 0
      %p250 = por %p248, %p249
      %s251 = ssub.s32 %s29, %s41
      %p252 = scmp.eq.s32.totalorder %s251, 0
      %s254 = sadd.s32 %s253, 1
      %s255 = scalar_select %p252, %s253, %s254
      %p258 = pneg %p252
      %p259 = scmp.eq.s32.totalorder %s22, 1
      %p260 = por %p258, %p259
      %p261 = scmp.ne.s32.totalorder %s253, %s256
      %p262 = scmp.eq.s32.totalorder %s22, 0
      %p263 = por %p261, %p262
      %p264 = scmp.ne.s32.totalorder %s253, %s256
      %p265 = scmp.eq.s32.totalorder %s27, 1
      %p266 = por %p264, %p265
      %p267 = scmp.ne.s32.totalorder %s256, %s257
      %p268 = scmp.eq.s32.totalorder %s27, 0
      %p269 = por %p267, %p268
      %p270 = scmp.ne.s32.totalorder %s256, %s257
      %p271 = scmp.eq.s32.totalorder %s28, 1
      %p272 = por %p270, %p271
      %p274 = scmp.ne.s32.totalorder %s257, %s273
      %p275 = scmp.eq.s32.totalorder %s28, 0
      %p276 = por %p274, %p275
      %p277 = scmp.le.s32.totalorder 1, %s22
      %p278 = scmp.lt.s32.totalorder %s22, 3
      %p279 = pnand %p277, %p278
      %p280 = pneg %p279
      // Predicated region
      $region9: #{tpu_custom_call.1} parent=5 // pred_check
        _
      $region10: #{tpu_custom_call.1} parent=5 // pred_check_branch
        %282 = sbr.rel (%p279) target = $region12
      $region11: #{tpu_custom_call.1} parent=5 // pred_region
        %s283 = ssub.s32 %s22, 1
        // Predicated region
        $region13: #{tpu_custom_call.1} parent=11 // pred_check
          %p284 = pneg %p81
        $region14: #{tpu_custom_call.1} parent=11 // pred_check_branch
          %286 = sbr.rel (%p284) target = $region16
        $region15: #{tpu_custom_call.1} parent=11 // pred_region
          _
        $region16: #{tpu_custom_call.1} parent=11 // pred_fallthru
          _
        // Predicated region
        $region17: #{tpu_custom_call.1} parent=11 // pred_check
          %p287 = pneg %p102
        $region18: #{tpu_custom_call.1} parent=11 // pred_check_branch
          %289 = sbr.rel (%p287) target = $region20
        $region19: #{tpu_custom_call.1} parent=11 // pred_region
          _
        $region20: #{tpu_custom_call.1} parent=11 // pred_fallthru
          _
        // Predicated region
        $region21: #{tpu_custom_call.1} parent=11 // pred_check
          %p290 = pneg %p128
        $region22: #{tpu_custom_call.1} parent=11 // pred_check_branch
          %292 = sbr.rel (%p290) target = $region24
        $region23: #{tpu_custom_call.1} parent=11 // pred_region
          %s294 = ssub.s32 1024, 1024
          %295 = vsyncadd [#allocation8], %s294
          %s296 = smul.addr %s32, 64
          %s297 = scalar_lea.hbm %s3, %s296
          %s298 = sshll.u32 [#allocation7], 4
          %s299 = int_to_ptr.vmem [resolvable:$true] %s298
          %304 = dma.hbm_to_vmem [thread:$0]  %s297, 1024, %s299, [#allocation8], 64, 64, 4
        $region24: #{tpu_custom_call.1} parent=11 // pred_fallthru
          _
        // Predicated region
        $region25: #{tpu_custom_call.1} parent=11 // pred_check
          %p305 = pneg %p154
        $region26: #{tpu_custom_call.1} parent=11 // pred_check_branch
          %307 = sbr.rel (%p305) target = $region28
        $region27: #{tpu_custom_call.1} parent=11 // pred_region
          %p308 = scmp.lt.s32.totalorder %s32, 0
          %s309 = scalar_select %p308, %s32, 0
          %s310 = scalar_lea.vmem %s4, %s309
        $region28: #{tpu_custom_call.1} parent=11 // pred_fallthru
          _
        // Predicated region
        $region29: #{tpu_custom_call.1} parent=11 // pred_check
          %p311 = pneg %p180
        $region30: #{tpu_custom_call.1} parent=11 // pred_check_branch
          %313 = sbr.rel (%p311) target = $region32
        $region31: #{tpu_custom_call.1} parent=11 // pred_region
          %s314 = smul.u32 16, %s32
          %s316 = ssub.s32 1024, 1024
          %317 = vsyncadd [#allocation8], %s316
          %s318 = smul.addr %s314, 64
          %s319 = scalar_lea.hbm %s5, %s318
          %s320 = sshll.u32 [#allocation9], 4
          %s321 = int_to_ptr.vmem [resolvable:$true] %s320
          %326 = dma.hbm_to_vmem [thread:$0]  %s319, 1024, %s321, [#allocation8], 64, 64, 4
        $region32: #{tpu_custom_call.1} parent=11 // pred_fallthru
          _
        // Predicated region
        $region33: #{tpu_custom_call.1} parent=11 // pred_check
          %p327 = pneg %p201
        $region34: #{tpu_custom_call.1} parent=11 // pred_check_branch
          %329 = sbr.rel (%p327) target = $region36
        $region35: #{tpu_custom_call.1} parent=11 // pred_region
          _
        $region36: #{tpu_custom_call.1} parent=11 // pred_fallthru
          _
        // Predicated region
        $region37: #{tpu_custom_call.1} parent=11 // pred_check
          %p330 = pneg %p222
        $region38: #{tpu_custom_call.1} parent=11 // pred_check_branch
          %332 = sbr.rel (%p330) target = $region40
        $region39: #{tpu_custom_call.1} parent=11 // pred_region
          _
        $region40: #{tpu_custom_call.1} parent=11 // pred_fallthru
          _
        // Predicated region
        $region41: #{tpu_custom_call.1} parent=11 // pred_check
          %p333 = pneg %p243
        $region42: #{tpu_custom_call.1} parent=11 // pred_check_branch
          %335 = sbr.rel (%p333) target = $region44
        $region43: #{tpu_custom_call.1} parent=11 // pred_region
          _
        $region44: #{tpu_custom_call.1} parent=11 // pred_fallthru
          _
      $region12: #{tpu_custom_call.1} parent=5 // pred_fallthru
        _
      %p336 = scmp.lt.s32.totalorder %s22, 2
      // Predicated region
      $region45: #{tpu_custom_call.1} parent=5 // pred_check
        %p337 = pneg %p336
      $region46: #{tpu_custom_call.1} parent=5 // pred_check_branch
        %339 = sbr.rel (%p337) target = $region48
      $region47: #{tpu_custom_call.1} parent=5 // pred_region
        // Predicated region
        $region49: #{tpu_custom_call.1} parent=47 // pred_check
          %p340 = pneg %p54
        $region50: #{tpu_custom_call.1} parent=47 // pred_check_branch
          %342 = sbr.rel (%p340) target = $region52
        $region51: #{tpu_custom_call.1} parent=47 // pred_region
          %s343 = sand.u32 %s44, 1
          %s344 = scalar_lea.sflag [#allocation5], %s343
          %s345 = sand.u32 %s44, 1
          %s346 = smul.addr %s345, 4
          %s347 = scalar_lea.vmem [#allocation4], %s346
          %s349 = ssub.s32 64, 64
          %350 = vsyncadd %s344, %s349
          %s351 = smul.addr %s29, 64
          %s352 = scalar_lea.hbm %s0, %s351
          %s354 = sshll.u32 %s347, 4
          %s355 = int_to_ptr.vmem [resolvable:$true] %s354
          %357 = dma.hbm_to_vmem [thread:$0]  %s352, 64, %s355, %s344
        $region52: #{tpu_custom_call.1} parent=47 // pred_fallthru
          _
      $region48: #{tpu_custom_call.1} parent=5 // pred_fallthru
        _
      %p358 = scmp.le.s32.totalorder 1, %s22
      %p359 = scmp.lt.s32.totalorder %s22, 3
      %p360 = pnand %p358, %p359
      %p361 = pneg %p360
      // Predicated region
      $region53: #{tpu_custom_call.1} parent=5 // pred_check
        _
      $region54: #{tpu_custom_call.1} parent=5 // pred_check_branch
        %363 = sbr.rel (%p360) target = $region56
      $region55: #{tpu_custom_call.1} parent=5 // pred_region
        %s364 = ssub.s32 %s22, 1
        %s365 = sand.u32 %s47, 1
        %s366 = scalar_lea.sflag [#allocation5], %s365
        %s367 = sand.u32 %s47, 1
        %s368 = smul.addr %s367, 4
        %s369 = scalar_lea.vmem [#allocation4], %s368
        // Predicated region
        $region57: #{tpu_custom_call.1} parent=55 // pred_check
          %p370 = pneg %p60
        $region58: #{tpu_custom_call.1} parent=55 // pred_check_branch
          %372 = sbr.rel (%p370) target = $region60
        $region59: #{tpu_custom_call.1} parent=55 // pred_region
          %373 = dma.done %s366, 64
        $region60: #{tpu_custom_call.1} parent=55 // pred_fallthru
          _
        // Predicated region
        $region61: #{tpu_custom_call.1} parent=55 // pred_check
          %p374 = pneg %p128
        $region62: #{tpu_custom_call.1} parent=55 // pred_check_branch
          %376 = sbr.rel (%p374) target = $region64
        $region63: #{tpu_custom_call.1} parent=55 // pred_region
          %377 = dma.done [#allocation8], 1024
        $region64: #{tpu_custom_call.1} parent=55 // pred_fallthru
          _
        // Predicated region
        $region65: #{tpu_custom_call.1} parent=55 // pred_check
          %p378 = pneg %p180
        $region66: #{tpu_custom_call.1} parent=55 // pred_check_branch
          %380 = sbr.rel (%p378) target = $region68
        $region67: #{tpu_custom_call.1} parent=55 // pred_region
          %381 = dma.done [#allocation8], 1024
        $region68: #{tpu_custom_call.1} parent=55 // pred_fallthru
          _
        %s382 = sand.u32 %s47, 1
        %s383 = scalar_lea.sflag [#allocation5], %s382
        %s384 = sand.u32 %s47, 1
        %s385 = smul.addr %s384, 4
        %s386 = scalar_lea.vmem [#allocation4], %s385
        %p387 = pneg %p60
        %p388 = pneg %p57
        %p389 = pneg %p81
        %p390 = pneg %p78
        %p391 = pneg %p102
        %p392 = pneg %p99
        %p393 = pneg %p128
        %p394 = pneg %p125
        %p395 = scmp.lt.s32.totalorder %s32, 0
        %s396 = scalar_select %p395, %s32, 0
        %s397 = scalar_lea.vmem %s4, %s396
        %p398 = pneg %p154
        %p399 = pneg %p151
        %p400 = pneg %p180
        %p401 = pneg %p177
        %p402 = pneg %p201
        %p403 = pneg %p198
        %p404 = pneg %p222
        %p405 = pneg %p219
        %p406 = pneg %p243
        %p407 = pneg %p240
        %p408 = pneg %p269
        %p409 = pneg %p266
        %s410 = sand.u32 %s256, 1
        %s411 = scalar_lea.sflag [#allocation6], %s410
        %s412 = sand.u32 %s256, 1
        %s413 = smul.addr %s412, 8
        %s414 = scalar_lea.vmem [#allocation10], %s413
        %p415 = scmp.lt.s32.totalorder %s32, 0
        %s416 = scalar_select %p415, %s32, 0
        %s417 = scalar_lea.vmem %s4, %s416
        %s418 = smul.u32 16, %s32
        %p420 = scmp.eq.s32.totalorder %s32, 0
        // Predicated region
        $region69: #{tpu_custom_call.1} parent=55 // pred_check
          %p421 = pneg %p420
        $region70: #{tpu_custom_call.1} parent=55 // pred_check_branch
          %423 = sbr.rel (%p421) target = $region72
        $region71: #{tpu_custom_call.1} parent=55 // pred_region
          %v424 = vld [vmem:[%s369] sm:$0xf]
          %v425 = vunpack.c.l.bf16 %v424
          %v426 = vld [vmem:[%s1] sm:$0x1]
          %v427 = vld [vmem:[%s2] sm:$0x1]
          %428 = vadd.xlane.f32.xlu0 %v425
          %v429 = vpop.xlane.xlu0 %428
          %v430 = vmul.f32 %v429, 0.03125
          %v431 = vmul.f32 %v425, %v425
          %432 = vadd.xlane.f32.xlu0 %v431
          %v433 = vpop.xlane.xlu0 %432
          %v434 = vmul.f32 %v433, 0.03125
          %v435 = vmul.f32 %v430, %v430
          %v436 = vsub.f32 %v434, %v435
          %v437 = vsub.f32 %v425, %v430
          %v438 = vadd.f32 %v436, 1e-05
          %v439 = vrsqrt.pop %v438
          %v440 = vmul.f32 %v437, %v439
          %v442 = vlaneseq
          %v443 = vshrl.u32 %v442, 7
          %v444 = vsub.s32 0, %v443
          %v445 = vrot.slane %v426, %v444
          %v447 = vmul.f32 %v440, %v445
          %v449 = vlaneseq
          %v450 = vshrl.u32 %v449, 7
          %v451 = vsub.s32 0, %v450
          %v452 = vrot.slane %v427, %v451
          %v454 = vadd.f32 %v447, %v452
          %455 = vst [vmem:[#allocation2] sm:$0xff] %v454
          %456 = vst [vmem:[#allocation3] sm:$0xff] 0.0
        $region72: #{tpu_custom_call.1} parent=55 // pred_fallthru
          _
        %v457 = vld [vmem:[#allocation2] sm:$0xff]
        %v458 = vpack.c.bf16 %v457, %v457
        %v459 = vld [vmem:[#allocation7] sm:$0xf]
        %v460 = vld [vmem:[#allocation7 + $0x4] sm:$0xf]
        %v461 = vld [vmem:[#allocation7 + $0x8] sm:$0xf]
        %v462 = vld [vmem:[#allocation7 + $0xc] sm:$0xf]
        %v463 = vld [vmem:[#allocation7 + $0x10] sm:$0xf]
        %v464 = vld [vmem:[#allocation7 + $0x14] sm:$0xf]
        %v465 = vld [vmem:[#allocation7 + $0x18] sm:$0xf]
        %v466 = vld [vmem:[#allocation7 + $0x1c] sm:$0xf]
        %v467 = vld [vmem:[#allocation7 + $0x20] sm:$0xf]
        %v468 = vld [vmem:[#allocation7 + $0x24] sm:$0xf]
        %v469 = vld [vmem:[#allocation7 + $0x28] sm:$0xf]
        %v470 = vld [vmem:[#allocation7 + $0x2c] sm:$0xf]
        %v471 = vld [vmem:[#allocation7 + $0x30] sm:$0xf]
        %v472 = vld [vmem:[#allocation7 + $0x34] sm:$0xf]
        %v473 = vld [vmem:[#allocation7 + $0x38] sm:$0xf]
        %v474 = vld [vmem:[#allocation7 + $0x3c] sm:$0xf]
        %v475 = vld [vmem:[%s417] sm:$0x1]
        %v477 = vlaneseq
        %v478 = vshrl.u32 %v477, 7
        %v479 = vsub.s32 0, %v478
        %v480 = vrot.slane %v475, %v479
        %v498 = vunpack.c.l.b16 %v459
        %v499 = vunpack.c.l.b16 %v460
        %v500 = vunpack.c.l.b16 %v461
        %v501 = vunpack.c.l.b16 %v462
        %v502 = vunpack.c.l.b16 %v463
        %v503 = vunpack.c.l.b16 %v464
        %v504 = vunpack.c.l.b16 %v465
        %v505 = vunpack.c.l.b16 %v466
        %v506 = vunpack.c.l.b16 %v467
        %v507 = vunpack.c.l.b16 %v468
        %v508 = vunpack.c.l.b16 %v469
        %v509 = vunpack.c.l.b16 %v470
        %v510 = vunpack.c.l.b16 %v471
        %v511 = vunpack.c.l.b16 %v472
        %v512 = vunpack.c.l.b16 %v473
        %v513 = vunpack.c.l.b16 %v474
        %v514 = vpack.c.b16 %v499, %v498
        %v515 = vpack.c.b16 %v501, %v500
        %v516 = vpack.c.b16 %v503, %v502
        %v517 = vpack.c.b16 %v505, %v504
        %v518 = vpack.c.b16 %v507, %v506
        %v519 = vpack.c.b16 %v509, %v508
        %v520 = vpack.c.b16 %v511, %v510
        %v521 = vpack.c.b16 %v513, %v512
        %530 = vmatprep.subr.bf16.mxu0 0
        %531 = vmatpush1.bf16.msra.mxu0 %v521
        %532 = vmatprep.subr.bf16.mxu0 0
        %533 = vmatpush1.bf16.msra.mxu0 %v520
        %534 = vmatprep.subr.bf16.mxu0 0
        %535 = vmatpush1.bf16.msra.mxu0 %v519
        %536 = vmatprep.subr.bf16.mxu0 0
        %537 = vmatpush1.bf16.msra.mxu0 %v518
        %538 = vmatprep.subr.bf16.mxu0 0
        %539 = vmatpush1.bf16.msra.mxu0 %v517
        %540 = vmatprep.subr.bf16.mxu0 0
        %541 = vmatpush1.bf16.msra.mxu0 %v516
        %542 = vmatprep.subr.bf16.mxu0 0
        %543 = vmatpush1.bf16.msra.mxu0 %v515
        %544 = vmatprep.subr.bf16.mxu0 0
        %545 = vmatpush1.bf16.msra.mxu0 %v514
        %546 = vmatprep.subr.bf16.mxu0 0
        %547 = vmatpush2.bf16.msra.mxu0 0
        %548 = vmatprep.subr.bf16.mxu0 0
        %549 = vmatpush2.bf16.msra.mxu0 0
        %550 = vmatprep.subr.bf16.mxu0 0
        %551 = vmatpush2.bf16.msra.mxu0 0
        %552 = vmatprep.subr.bf16.mxu0 0
        %553 = vmatpush2.bf16.msra.mxu0 0
        %554 = vmatprep.subr.bf16.mxu0 0
        %555 = vmatpush2.bf16.msra.mxu0 0
        %556 = vmatprep.subr.bf16.mxu0 0
        %557 = vmatpush2.bf16.msra.mxu0 0
        %558 = vmatprep.subr.bf16.mxu0 0
        %559 = vmatpush2.bf16.msra.mxu0 0
        %560 = vmatprep.subr.bf16.mxu0 0
        %561 = vmatpush2.bf16.msra.mxu0 0
        %562 = vmatprep.mubr.bf16.mxu0 0
        %563 = vmatmul.mubr.bf16.gmra.mxu0 %v458
        %v564 = vpop.f32.mrf.mxu0
        %v565 = vadd.f32 %v480, %v564
        %v566 = vpop.f32.mrf.mxu0
        %v567 = vpop.f32.mrf.mxu0
        %v568 = vpop.f32.mrf.mxu0
        %569 = vdwg.mxu0
        %v570 = vmax.f32 %v565, 0.0
        %v571 = vld [vmem:[#allocation3] sm:$0xff]
        %v572 = vpack.c.bf16 %v570, %v570
        %v573 = vld [vmem:[#allocation9] sm:$0xf]
        %v574 = vld [vmem:[#allocation9 + $0x4] sm:$0xf]
        %v575 = vld [vmem:[#allocation9 + $0x8] sm:$0xf]
        %v576 = vld [vmem:[#allocation9 + $0xc] sm:$0xf]
        %v577 = vld [vmem:[#allocation9 + $0x10] sm:$0xf]
        %v578 = vld [vmem:[#allocation9 + $0x14] sm:$0xf]
        %v579 = vld [vmem:[#allocation9 + $0x18] sm:$0xf]
        %v580 = vld [vmem:[#allocation9 + $0x1c] sm:$0xf]
        %v581 = vld [vmem:[#allocation9 + $0x20] sm:$0xf]
        %v582 = vld [vmem:[#allocation9 + $0x24] sm:$0xf]
        %v583 = vld [vmem:[#allocation9 + $0x28] sm:$0xf]
        %v584 = vld [vmem:[#allocation9 + $0x2c] sm:$0xf]
        %v585 = vld [vmem:[#allocation9 + $0x30] sm:$0xf]
        %v586 = vld [vmem:[#allocation9 + $0x34] sm:$0xf]
        %v587 = vld [vmem:[#allocation9 + $0x38] sm:$0xf]
        %v588 = vld [vmem:[#allocation9 + $0x3c] sm:$0xf]
        %v605 = vunpack.c.l.b16 %v573
        %v606 = vunpack.c.l.b16 %v574
        %v607 = vunpack.c.l.b16 %v575
        %v608 = vunpack.c.l.b16 %v576
        %v609 = vunpack.c.l.b16 %v577
        %v610 = vunpack.c.l.b16 %v578
        %v611 = vunpack.c.l.b16 %v579
        %v612 = vunpack.c.l.b16 %v580
        %v613 = vunpack.c.l.b16 %v581
        %v614 = vunpack.c.l.b16 %v582
        %v615 = vunpack.c.l.b16 %v583
        %v616 = vunpack.c.l.b16 %v584
        %v617 = vunpack.c.l.b16 %v585
        %v618 = vunpack.c.l.b16 %v586
        %v619 = vunpack.c.l.b16 %v587
        %v620 = vunpack.c.l.b16 %v588
        %v621 = vpack.c.b16 %v606, %v605
        %v622 = vpack.c.b16 %v608, %v607
        %v623 = vpack.c.b16 %v610, %v609
        %v624 = vpack.c.b16 %v612, %v611
        %v625 = vpack.c.b16 %v614, %v613
        %v626 = vpack.c.b16 %v616, %v615
        %v627 = vpack.c.b16 %v618, %v617
        %v628 = vpack.c.b16 %v620, %v619
        %637 = vmatprep.subr.bf16.mxu0 0
        %638 = vmatpush1.bf16.msra.mxu0 %v628
        %639 = vmatprep.subr.bf16.mxu0 0
        %640 = vmatpush1.bf16.msra.mxu0 %v627
        %641 = vmatprep.subr.bf16.mxu0 0
        %642 = vmatpush1.bf16.msra.mxu0 %v626
        %643 = vmatprep.subr.bf16.mxu0 0
        %644 = vmatpush1.bf16.msra.mxu0 %v625
        %645 = vmatprep.subr.bf16.mxu0 0
        %646 = vmatpush1.bf16.msra.mxu0 %v624
        %647 = vmatprep.subr.bf16.mxu0 0
        %648 = vmatpush1.bf16.msra.mxu0 %v623
        %649 = vmatprep.subr.bf16.mxu0 0
        %650 = vmatpush1.bf16.msra.mxu0 %v622
        %651 = vmatprep.subr.bf16.mxu0 0
        %652 = vmatpush1.bf16.msra.mxu0 %v621
        %653 = vmatprep.subr.bf16.mxu0 0
        %654 = vmatpush2.bf16.msra.mxu0 0
        %655 = vmatprep.subr.bf16.mxu0 0
        %656 = vmatpush2.bf16.msra.mxu0 0
        %657 = vmatprep.subr.bf16.mxu0 0
        %658 = vmatpush2.bf16.msra.mxu0 0
        %659 = vmatprep.subr.bf16.mxu0 0
        %660 = vmatpush2.bf16.msra.mxu0 0
        %661 = vmatprep.subr.bf16.mxu0 0
        %662 = vmatpush2.bf16.msra.mxu0 0
        %663 = vmatprep.subr.bf16.mxu0 0
        %664 = vmatpush2.bf16.msra.mxu0 0
        %665 = vmatprep.subr.bf16.mxu0 0
        %666 = vmatpush2.bf16.msra.mxu0 0
        %667 = vmatprep.subr.bf16.mxu0 0
        %668 = vmatpush2.bf16.msra.mxu0 0
        %669 = vmatprep.mubr.bf16.mxu0 0
        %670 = vmatmul.mubr.bf16.gmra.mxu0 %v572
        %v671 = vpop.f32.mrf.mxu0
        %v672 = vadd.f32 0.0, %v671
        %v673 = vpop.f32.mrf.mxu0
        %v674 = vpop.f32.mrf.mxu0
        %v675 = vpop.f32.mrf.mxu0
        %676 = vdwg.mxu0
        %v677 = vadd.f32 %v571, %v672
        %678 = vst [vmem:[#allocation3] sm:$0xff] %v677
        // Predicated region
        $region73: #{tpu_custom_call.1} parent=55 // pred_check
          %p679 = pneg %p420
        $region74: #{tpu_custom_call.1} parent=55 // pred_check_branch
          %681 = sbr.rel (%p679) target = $region76
        $region75: #{tpu_custom_call.1} parent=55 // pred_region
          %v682 = vld [vmem:[#allocation3] sm:$0xff]
          %v683 = vld [vmem:[%s6] sm:$0x1]
          %v685 = vlaneseq
          %v686 = vshrl.u32 %v685, 7
          %v687 = vsub.s32 0, %v686
          %v688 = vrot.slane %v683, %v687
          %v690 = vadd.f32 %v682, %v688
          %v691 = vld [vmem:[#allocation2] sm:$0xff]
          %v692 = vadd.f32 %v691, %v690
          %v693 = vld [vmem:[%s7] sm:$0x1]
          %v694 = vld [vmem:[%s8] sm:$0x1]
          %695 = vadd.xlane.f32.xlu0 %v692
          %v696 = vpop.xlane.xlu0 %695
          %v697 = vmul.f32 %v696, 0.03125
          %v698 = vmul.f32 %v692, %v692
          %699 = vadd.xlane.f32.xlu0 %v698
          %v700 = vpop.xlane.xlu0 %699
          %v701 = vmul.f32 %v700, 0.03125
          %v702 = vmul.f32 %v697, %v697
          %v703 = vsub.f32 %v701, %v702
          %v704 = vsub.f32 %v692, %v697
          %v705 = vadd.f32 %v703, 1e-05
          %v706 = vrsqrt.pop %v705
          %v707 = vmul.f32 %v704, %v706
          %v709 = vlaneseq
          %v710 = vshrl.u32 %v709, 7
          %v711 = vsub.s32 0, %v710
          %v712 = vrot.slane %v693, %v711
          %v714 = vmul.f32 %v707, %v712
          %v716 = vlaneseq
          %v717 = vshrl.u32 %v716, 7
          %v718 = vsub.s32 0, %v717
          %v719 = vrot.slane %v694, %v718
          %v721 = vadd.f32 %v714, %v719
          %722 = vst [vmem:[%s414] sm:$0xff] %v721
        $region76: #{tpu_custom_call.1} parent=55 // pred_fallthru
          _
        %s723 = sand.u32 %s256, 1
        %s724 = scalar_lea.sflag [#allocation6], %s723
        %s725 = sand.u32 %s256, 1
        %s726 = smul.addr %s725, 8
        %s727 = scalar_lea.vmem [#allocation10], %s726
        // Predicated region
        $region77: #{tpu_custom_call.1} parent=55 // pred_check
          %p728 = pneg %p266
        $region78: #{tpu_custom_call.1} parent=55 // pred_check_branch
          %730 = sbr.rel (%p728) target = $region80
        $region79: #{tpu_custom_call.1} parent=55 // pred_region
          %s732 = ssub.s32 128, 128
          %733 = vsyncadd %s724, %s732
          %s734 = smul.addr %s31, 128
          %s735 = scalar_lea.hbm %s9, %s734
          %s737 = sshll.u32 %s727, 4
          %s738 = int_to_ptr.vmem [resolvable:$true] %s737
          %740 = dma.vmem_to_hbm [thread:$0]  %s738, 128, %s735, %s724
        $region80: #{tpu_custom_call.1} parent=55 // pred_fallthru
          _
      $region56: #{tpu_custom_call.1} parent=5 // pred_fallthru
        _
      %p741 = scmp.le.s32.totalorder 2, %s22
      // Predicated region
      $region81: #{tpu_custom_call.1} parent=5 // pred_check
        %p742 = pneg %p741
      $region82: #{tpu_custom_call.1} parent=5 // pred_check_branch
        %744 = sbr.rel (%p742) target = $region84
      $region83: #{tpu_custom_call.1} parent=5 // pred_region
        %s745 = ssub.s32 %s22, 2
        // Predicated region
        $region85: #{tpu_custom_call.1} parent=83 // pred_check
          %p746 = pneg %p272
        $region86: #{tpu_custom_call.1} parent=83 // pred_check_branch
          %748 = sbr.rel (%p746) target = $region88
        $region87: #{tpu_custom_call.1} parent=83 // pred_region
          %s749 = sand.u32 %s257, 1
          %s750 = scalar_lea.sflag [#allocation6], %s749
          %s751 = sand.u32 %s257, 1
          %s752 = smul.addr %s751, 8
          %s753 = scalar_lea.vmem [#allocation10], %s752
          %754 = dma.done %s750, 128
        $region88: #{tpu_custom_call.1} parent=83 // pred_fallthru
          _
      $region84: #{tpu_custom_call.1} parent=5 // pred_fallthru
        _
    $region6: #{tpu_custom_call.1} parent=1 // loop_footer
      %s26 = sadd.s32 1, %s22
    $region7: #{tpu_custom_call.1} parent=1 // loop_footer_branch
      %21 = sbr.rel target = $region3
    $region8: #{tpu_custom_call.1} parent=1 // loop_exit
      _
    %755 = vsyncpa [#allocation5], 1
    %s756 = scalar_lea.sflag [#allocation5], 1
    %757 = vsyncpa %s756, 1
    %758 = vsyncpa [#allocation8], 1
    %759 = vsyncpa [#allocation6], 1
    %s760 = scalar_lea.sflag [#allocation6], 1
    %761 = vsyncpa %s760, 1

</llo_original>
